<compile_context>
chip_gen: v7x
topology: tpu7x:2x2x1
jax: 0.10.0
libtpu: 0.0.40
codegen_flags: <defaults>
</compile_context>

<pallas_src>
import math
import functools

import numpy as np
import jax
import jax.numpy as jnp
from jax.experimental import pallas as pl
from jax.experimental.pallas import tpu as pltpu


OUT_DIM = 32      # stand-in DRN backbone out_dim (synthetic)
CLASSES = 4
PATCH = 8         # DRN output stride = 8 (stand-in base downsamples by 8)
UP_K, UP_S, UP_P = 16, 8, 4


def _round_up(x, m):
    return ((x + m - 1) // m) * m


def _vmem_budget():
    """Scoped-VMEM request: ~half of physical VMEM (64 MiB on v5e/v6e,
    32 MiB on v7x); 32 MiB safe fallback if the query is unavailable."""
    try:
        cap = pltpu.get_tpu_info().vmem_capacity_bytes
        return int(max(32 * 1024 * 1024, min(64 * 1024 * 1024, cap // 2)))
    except Exception:
        return 32 * 1024 * 1024


def _tile_and_pad(total, max_tile, multiple):
    """Return (tile, padded_total).  Picks the largest `multiple`-aligned tile
    <= max_tile dividing the (possibly padded) extent.  Never returns an
    unaligned tile or an un-tiled huge block."""
    if total <= max_tile:
        return total, total                      # full-extent block is legal
    start = (max_tile // multiple) * multiple
    for t in range(start, 0, -multiple):
        if total % t == 0:
            return t, total
    return start, _round_up(total, start)        # pad; caller slices the tail


def make_bilinear_up_matrix(h_in, kernel=UP_K, stride=UP_S, pad=UP_P):
    """1D matrix U such that the grouped ConvTranspose2d (16, stride 8, pad 4)
    with fill_up_weights() equals y = U @ x @ U^T per channel plane.  Built in
    numpy so it is a compile-time constant."""
    f = math.ceil(kernel / 2)
    c = (2 * f - 1 - f % 2) / (2.0 * f)
    w1d = np.array([1.0 - abs(i / f - c) for i in range(kernel)], np.float32)
    h_out = (h_in - 1) * stride - 2 * pad + kernel          # == stride * h_in
    u = np.zeros((h_out, h_in), np.float32)
    for oh in range(h_out):
        for ih in range(h_in):
            k = oh - ih * stride + pad
            if 0 <= k < kernel:
                u[oh, ih] = w1d[k]
    return u


# ----------------------------------------------------------------------------
# Kernel 1: fused base (patchify conv + ReLU stand-in) + seg 1x1 conv
# ----------------------------------------------------------------------------
def _base_seg_kernel(p_ref, bw_ref, bb_ref, sw_ref, sb_ref, o_ref):
    # p_ref : (1, K1, TM) bf16   patches, channels-leading, spatial on lanes
    # bw_ref: (OUT_DIM, K1) bf16 base weight^T     bb_ref: (OUT_DIM, 1) f32
    # sw_ref: (CLASSES, OUT_DIM) f32 seg weight^T  sb_ref: (CLASSES, 1) f32
    # o_ref : (1, CLASSES, TM) f32  seg logits, lane-dense spatial
    feat = jnp.dot(bw_ref[...], p_ref[0], preferred_element_type=jnp.float32)
    feat = jnp.maximum(feat + bb_ref[...], 0.0)              # stays in VMEM
    seg = jnp.dot(sw_ref[...], feat, preferred_element_type=jnp.float32)
    o_ref[0] = seg + sb_ref[...]


def base_seg(patchesT, base_wT, base_b, seg_wT, seg_b, *, max_row_tile=2048):
    n, k1, s = patchesT.shape
    out_dim = base_wT.shape[0]
    classes = seg_wT.shape[0]
    tm, s_run = _tile_and_pad(s, max_row_tile, 128)
    if s_run != s:
        patchesT = jnp.pad(patchesT, ((0, 0), (0, 0), (0, s_run - s)))
    out = pl.pallas_call(
        _base_seg_kernel,
        out_shape=jax.ShapeDtypeStruct((n, classes, s_run), jnp.float32),
        grid=(n, s_run // tm),
        in_specs=[
            pl.BlockSpec((1, k1, tm), lambda i, j: (i, 0, j)),
            pl.BlockSpec((out_dim, k1), lambda i, j: (0, 0)),
            pl.BlockSpec((out_dim, 1), lambda i, j: (0, 0)),
            pl.BlockSpec((classes, out_dim), lambda i, j: (0, 0)),
            pl.BlockSpec((classes, 1), lambda i, j: (0, 0)),
        ],
        out_specs=pl.BlockSpec((1, classes, tm), lambda i, j: (i, 0, j)),
        compiler_params=pltpu.CompilerParams(
            dimension_semantics=("parallel", "parallel"),
            vmem_limit_bytes=_vmem_budget()),
    )(patchesT.astype(jnp.bfloat16),           # bf16 stream, f32 accumulation
      base_wT.astype(jnp.bfloat16),
      base_b.reshape(out_dim, 1).astype(jnp.float32),
      seg_wT.astype(jnp.float32),
      seg_b.reshape(classes, 1).astype(jnp.float32))
    if s_run != s:
        out = out[:, :, :s]
    return out


# ----------------------------------------------------------------------------
# Kernel 2: fused bilinear x8 deconv (separable) + LogSoftmax/Softmax (dim=1)
# ----------------------------------------------------------------------------
def _up_softmax_kernel(seg_ref, uh_ref, uwT_ref, logsm_ref, sm_ref, z_ref,
                       *, classes, hf):
    # seg_ref : (1, C*Hf, Wf)  all channels of one image, stacked on sublanes
    # uh_ref  : (TH, Hf)       rows of U_h for this output-row tile
    # uwT_ref : (Wf, Wo)
    # z_ref   : (C*Hf, Wo)     VMEM scratch, persists across row tiles
    # outputs : (1, C, TH, Wo) lane-dense (Wo on lanes)
    @pl.when(pl.program_id(1) == 0)
    def _():
        # Batched, lane-dense width stage; re-used by every row tile of this
        # image (row-tile axis is "arbitrary" => sequential, scratch persists).
        z_ref[...] = jnp.dot(seg_ref[0], uwT_ref[...],
                             preferred_element_type=jnp.float32)

    uh = uh_ref[...]
    # Pass 1: height stage per class; y_c streams straight into logsm_ref
    # (used as scratch) while tracking the running per-pixel channel max.
    m = None
    for c in range(classes):                    # static unroll, C is small
        y = jnp.dot(uh, z_ref[c * hf:(c + 1) * hf, :],
                    preferred_element_type=jnp.float32)
        logsm_ref[0, c] = y
        m = y if m is None else jnp.maximum(m, y)
    # Pass 2: exponentials stream into sm_ref while accumulating the denom.
    s = None
    for c in range(classes):
        e = jnp.exp(logsm_ref[0, c] - m)
        sm_ref[0, c] = e
        s = e if s is None else s + e
    inv = pl.reciprocal(s, approx=False)        # exact: rows sum to 1 in f32
    mlogs = m + jnp.log(s)
    # Pass 3: normalize both outputs in place.
    for c in range(classes):
        sm_ref[0, c] = sm_ref[0, c] * inv
        logsm_ref[0, c] = logsm_ref[0, c] - mlogs


def up_softmax(x_seg, *, max_row_tile=256):
    n, c, hf, wf = x_seg.shape
    uh_np = make_bilinear_up_matrix(hf)                 # (Ho, Hf) constant
    uw_np = make_bilinear_up_matrix(wf)                 # (Wo, Wf) constant
    ho, wo = uh_np.shape[0], uw_np.shape[0]
    th, ho_run = _tile_and_pad(ho, max_row_tile, 8)
    if ho_run != ho:
        uh_np = np.pad(uh_np, ((0, ho_run - ho), (0, 0)))
    uh = jnp.asarray(uh_np)
    uwT = jnp.asarray(uw_np.T)                          # (Wf, Wo)
    seg2d = x_seg.astype(jnp.float32).reshape(n, c * hf, wf)   # pure reshape
    kern = functools.partial(_up_softmax_kernel, classes=c, hf=hf)
    logsm, sm = pl.pallas_call(
        kern,
        out_shape=(jax.ShapeDtypeStruct((n, c, ho_run, wo), jnp.float32),
                   jax.ShapeDtypeStruct((n, c, ho_run, wo), jnp.float32)),
        grid=(n, ho_run // th),
        in_specs=[
            pl.BlockSpec((1, c * hf, wf), lambda i, j: (i, 0, 0)),
            pl.BlockSpec((th, hf), lambda i, j: (j, 0)),
            pl.BlockSpec((wf, wo), lambda i, j: (0, 0)),
        ],
        out_specs=(
            pl.BlockSpec((1, c, th, wo), lambda i, j: (i, 0, j, 0)),
            pl.BlockSpec((1, c, th, wo), lambda i, j: (i, 0, j, 0)),
        ),
        scratch_shapes=[pltpu.VMEM((c * hf, wo), jnp.float32)],
        compiler_params=pltpu.CompilerParams(
            dimension_semantics=("parallel", "arbitrary"),
            vmem_limit_bytes=_vmem_budget()),
    )(seg2d, uh, uwT)
    if ho_run != ho:
        logsm = logsm[:, :, :ho, :]
        sm = sm[:, :, :ho, :]
    return logsm, sm


# ----------------------------------------------------------------------------
# Model setup + forward (mirrors DRNSeg.forward)
# ----------------------------------------------------------------------------
def init_params(key, c_in):
    k1, k2 = jax.random.split(key)
    k1_dim = c_in * PATCH * PATCH
    base_wT = jax.random.normal(k1, (OUT_DIM, k1_dim), jnp.float32) * 0.05
    base_b = jnp.zeros((OUT_DIM,), jnp.float32)
    # seg 1x1 conv: weight ~ N(0, sqrt(2/(1*1*classes))), bias zero (PyTorch init)
    seg_wT = jax.random.normal(k2, (CLASSES, OUT_DIM), jnp.float32) * math.sqrt(
        2.0 / (1 * 1 * CLASSES))
    seg_b = jnp.zeros((CLASSES,), jnp.float32)
    return dict(base_wT=base_wT, base_b=base_b, seg_wT=seg_wT, seg_b=seg_b)


def drnseg_forward(x, params):
    n, c_in, h, w = x.shape
    assert h % PATCH == 0 and w % PATCH == 0
    hf, wf = h // PATCH, w // PATCH
    s = hf * wf

    # --- self.base(x) ---
    # TODO(synk): the pretrained DRN backbone (drn.__dict__[model_name]) cannot
    # be reproduced in-script; a stride-8 patchify conv + ReLU with the same
    # output stride (8) and out_dim stands in.
    xb = x.astype(jnp.bfloat16)       # cast BEFORE the transpose: halves the
    patchesT = xb.reshape(n, c_in, hf, PATCH, wf, PATCH)   # front-end traffic
    patchesT = patchesT.transpose(0, 1, 3, 5, 2, 4).reshape(
        n, c_in * PATCH * PATCH, s)

    # Fused base matmul + ReLU + seg 1x1 conv (feat never leaves VMEM).
    seg = base_seg(patchesT, params["base_wT"], params["base_b"],
                   params["seg_wT"], params["seg_b"])          # (N, C, Hf*Wf)
    x_seg = seg.reshape(n, CLASSES, hf, wf)                    # NCHW, reshape only

    # Fused grouped 16x16/stride-8 bilinear deconv + LogSoftmax/Softmax(dim=1).
    logsm, sm = up_softmax(x_seg)
    return logsm, x_seg, sm


# ----------------------------------------------------------------------------
# Pure-JAX reference (for sanity checks only; mimics the bf16 input rounding)
# ----------------------------------------------------------------------------
def _reference_forward(x, params):
    hi = jax.lax.Precision.HIGHEST
    n, c_in, h, w = x.shape
    hf, wf = h // PATCH, w // PATCH
    xb = x.astype(jnp.bfloat16).astype(jnp.float32)
    bw = params["base_wT"].astype(jnp.bfloat16).astype(jnp.float32)
    patchesT = xb.reshape(n, c_in, hf, PATCH, wf, PATCH).transpose(
        0, 1, 3, 5, 2, 4).reshape(n, c_in * PATCH * PATCH, hf * wf)
    feat = jnp.maximum(
        jnp.einsum("ok,nks->nos", bw, patchesT, precision=hi)
        + params["base_b"][None, :, None], 0.0)
    seg = (jnp.einsum("co,nos->ncs", params["seg_wT"], feat, precision=hi)
           + params["seg_b"][None, :, None])
    x_seg = seg.reshape(n, CLASSES, hf, wf)
    uh = jnp.asarray(make_bilinear_up_matrix(hf))
    uw = jnp.asarray(make_bilinear_up_matrix(wf))
    y = jnp.einsum("oh,nchw,pw->ncop", uh, x_seg, uw, precision=hi)
    return jax.nn.log_softmax(y, axis=1), x_seg, jax.nn.softmax(y, axis=1)


# ----------------------------------------------------------------------------
if __name__ == "__main__":
    key = jax.random.PRNGKey(0)
    kx, kp = jax.random.split(key)

    N, C_IN, H, W = 2, 3, 32, 32          # feature map 4x4, upsampled to 32x32
    x = jax.random.normal(kx, (N, C_IN, H, W), jnp.float32)
    params = init_params(kp, C_IN)

    fwd = jax.jit(drnseg_forward)
    logsm, x_seg, sm = fwd(x, params)
    jax.block_until_ready((logsm, x_seg, sm))

    assert logsm.shape == (N, CLASSES, H, W)
    assert sm.shape == (N, CLASSES, H, W)
    assert x_seg.shape == (N, CLASSES, H // PATCH, W // PATCH)

    # Sanity vs pure-JAX reference.
    ref_logsm, ref_x_seg, ref_sm = _reference_forward(x, params)
    assert jnp.allclose(x_seg, ref_x_seg, atol=1e-3, rtol=1e-3)
    assert jnp.allclose(logsm, ref_logsm, atol=2e-3, rtol=1e-3)
    assert jnp.allclose(sm, ref_sm, atol=2e-3)
    assert jnp.allclose(sm.sum(axis=1), 1.0, atol=1e-4)
    assert jnp.allclose(jnp.exp(logsm), sm, atol=1e-3)

    print("KERNEL_OK")
</pallas_src>

<mosaic_0001>
module attributes {stable_mosaic.version = 11 : i64} {
  func.func @_base_seg_kernel(%arg0: i32, %arg1: i32, %arg2: memref<1x192x16xbf16, #tpu.memory_space<vmem>>, %arg3: memref<32x192xbf16, #tpu.memory_space<vmem>>, %arg4: memref<32x1xf32, #tpu.memory_space<vmem>>, %arg5: memref<4x32xf32, #tpu.memory_space<vmem>>, %arg6: memref<4x1xf32, #tpu.memory_space<vmem>>, %arg7: memref<1x4x16xf32, #tpu.memory_space<vmem>>) attributes {dimension_semantics = [#tpu.dimension_semantics<parallel>, #tpu.dimension_semantics<parallel>], iteration_bounds = array<i64: 2, 1>, scalar_prefetch = 0 : i64, scratch_operands = 0 : i64, tpu.core_type = #tpu.core_type<tc>, window_params = [{transform_indices = @transform_0, window_bounds = array<i64: 1, 192, 16>}, {pipeline_mode = #tpu.pipeline_mode<synchronous>, transform_indices = @transform_1, window_bounds = array<i64: 32, 192>}, {pipeline_mode = #tpu.pipeline_mode<synchronous>, transform_indices = @transform_2, window_bounds = array<i64: 32, 1>}, {pipeline_mode = #tpu.pipeline_mode<synchronous>, transform_indices = @transform_3, window_bounds = array<i64: 4, 32>}, {pipeline_mode = #tpu.pipeline_mode<synchronous>, transform_indices = @transform_4, window_bounds = array<i64: 4, 1>}, {transform_indices = @transform_5, window_bounds = array<i64: 1, 4, 16>}]} {
    %c0 = arith.constant 0 : index
    %c0_0 = arith.constant 0 : index
    %0 = vector.load %arg3[%c0, %c0_0] : memref<32x192xbf16, #tpu.memory_space<vmem>>, vector<32x192xbf16>
    %c0_1 = arith.constant 0 : index
    %c0_2 = arith.constant 0 : index
    %c0_3 = arith.constant 0 : index
    %1 = vector.load %arg2[%c0_1, %c0_2, %c0_3] : memref<1x192x16xbf16, #tpu.memory_space<vmem>>, vector<1x192x16xbf16>
    %2 = vector.shape_cast %1 : vector<1x192x16xbf16> to vector<192x16xbf16>
    %cst = arith.constant dense<0.000000e+00> : vector<32x16xf32>
    %3 = tpu.matmul %0, %2, %cst {dimension_numbers = #tpu.dot_dimension_numbers<[1], [0], [0], [1], [0, 0, 1, 1], [], []>} : vector<32x192xbf16>, vector<192x16xbf16>, vector<32x16xf32> -> vector<32x16xf32>
    %c0_4 = arith.constant 0 : index
    %c0_5 = arith.constant 0 : index
    %4 = vector.load %arg4[%c0_4, %c0_5] : memref<32x1xf32, #tpu.memory_space<vmem>>, vector<32x1xf32>
    %5 = vector.broadcast %4 : vector<32x1xf32> to vector<32x16xf32>
    %6 = arith.addf %3, %5 : vector<32x16xf32>
    %cst_6 = arith.constant 0.000000e+00 : f32
    %7 = vector.broadcast %cst_6 : f32 to vector<32x16xf32>
    %8 = arith.maximumf %6, %7 : vector<32x16xf32>
    %c0_7 = arith.constant 0 : index
    %c0_8 = arith.constant 0 : index
    %9 = vector.load %arg5[%c0_7, %c0_8] : memref<4x32xf32, #tpu.memory_space<vmem>>, vector<4x32xf32>
    %cst_9 = arith.constant dense<0.000000e+00> : vector<4x16xf32>
    %10 = tpu.matmul %9, %8, %cst_9 {dimension_numbers = #tpu.dot_dimension_numbers<[1], [0], [0], [1], [0, 0, 1, 1], [], []>} : vector<4x32xf32>, vector<32x16xf32>, vector<4x16xf32> -> vector<4x16xf32>
    %c0_10 = arith.constant 0 : index
    %c0_11 = arith.constant 0 : index
    %11 = vector.load %arg6[%c0_10, %c0_11] : memref<4x1xf32, #tpu.memory_space<vmem>>, vector<4x1xf32>
    %12 = vector.broadcast %11 : vector<4x1xf32> to vector<4x16xf32>
    %13 = arith.addf %10, %12 : vector<4x16xf32>
    %c0_12 = arith.constant 0 : index
    %c0_13 = arith.constant 0 : index
    %c0_14 = arith.constant 0 : index
    %14 = vector.load %arg7[%c0_12, %c0_13, %c0_14] : memref<1x4x16xf32, #tpu.memory_space<vmem>>, vector<1x4x16xf32>
    %15 = vector.shape_cast %14 : vector<1x4x16xf32> to vector<4x16xf32>
    %16 = vector.shape_cast %13 : vector<4x16xf32> to vector<1x4x16xf32>
    tpu.vector_store %arg7[%c0_12, %c0_13, %c0_14], %16 {strides = array<i32>} : memref<1x4x16xf32, #tpu.memory_space<vmem>>, vector<1x4x16xf32>,
    return
  }
  func.func @transform_0(%arg0: i32, %arg1: i32) -> (i32, i32, i32) {
    %c0_i32 = arith.constant 0 : i32
    %c0_i32_0 = arith.constant 0 : i32
    return %arg0, %c0_i32, %arg1 : i32, i32, i32
  }
  func.func @transform_1(%arg0: i32, %arg1: i32) -> (i32, i32) {
    %c0_i32 = arith.constant 0 : i32
    %c0_i32_0 = arith.constant 0 : i32
    %c0_i32_1 = arith.constant 0 : i32
    return %c0_i32, %c0_i32_0 : i32, i32
  }
  func.func @transform_2(%arg0: i32, %arg1: i32) -> (i32, i32) {
    %c0_i32 = arith.constant 0 : i32
    %c0_i32_0 = arith.constant 0 : i32
    %c0_i32_1 = arith.constant 0 : i32
    return %c0_i32, %c0_i32_0 : i32, i32
  }
  func.func @transform_3(%arg0: i32, %arg1: i32) -> (i32, i32) {
    %c0_i32 = arith.constant 0 : i32
    %c0_i32_0 = arith.constant 0 : i32
    %c0_i32_1 = arith.constant 0 : i32
    return %c0_i32, %c0_i32_0 : i32, i32
  }
  func.func @transform_4(%arg0: i32, %arg1: i32) -> (i32, i32) {
    %c0_i32 = arith.constant 0 : i32
    %c0_i32_0 = arith.constant 0 : i32
    %c0_i32_1 = arith.constant 0 : i32
    return %c0_i32, %c0_i32_0 : i32, i32
  }
  func.func @transform_5(%arg0: i32, %arg1: i32) -> (i32, i32, i32) {
    %c0_i32 = arith.constant 0 : i32
    %c0_i32_0 = arith.constant 0 : i32
    return %arg0, %c0_i32, %arg1 : i32, i32, i32
  }
}

module attributes {stable_mosaic.version = 11 : i64} {
  func.func @_up_softmax_kernel(%arg0: i32, %arg1: i32, %arg2: memref<1x16x4xf32, #tpu.memory_space<vmem>>, %arg3: memref<32x4xf32, #tpu.memory_space<vmem>>, %arg4: memref<4x32xf32, #tpu.memory_space<vmem>>, %arg5: memref<1x4x32x32xf32, #tpu.memory_space<vmem>>, %arg6: memref<1x4x32x32xf32, #tpu.memory_space<vmem>>, %arg7: memref<16x32xf32, #tpu.memory_space<vmem>>) attributes {dimension_semantics = [#tpu.dimension_semantics<parallel>, #tpu.dimension_semantics<arbitrary>], iteration_bounds = array<i64: 2, 1>, scalar_prefetch = 0 : i64, scratch_operands = 1 : i64, tpu.core_type = #tpu.core_type<tc>, window_params = [{transform_indices = @transform_0, window_bounds = array<i64: 1, 16, 4>}, {transform_indices = @transform_1, window_bounds = array<i64: 32, 4>}, {pipeline_mode = #tpu.pipeline_mode<synchronous>, transform_indices = @transform_2, window_bounds = array<i64: 4, 32>}, {transform_indices = @transform_3, window_bounds = array<i64: 1, 4, 32, 32>}, {transform_indices = @transform_4, window_bounds = array<i64: 1, 4, 32, 32>}]} {
    %c0_i32 = arith.constant 0 : i32
    %0 = arith.cmpi eq, %arg1, %c0_i32 : i32
    %1 = arith.extui %0 : i1 to i32
    %c0_i32_0 = arith.constant 0 : i32
    %2 = arith.cmpi ne, %1, %c0_i32_0 : i32
    scf.if %2 {
      %c0_119 = arith.constant 0 : index
      %c0_120 = arith.constant 0 : index
      %c0_121 = arith.constant 0 : index
      %109 = vector.load %arg2[%c0_119, %c0_120, %c0_121] : memref<1x16x4xf32, #tpu.memory_space<vmem>>, vector<1x16x4xf32>
      %110 = vector.shape_cast %109 : vector<1x16x4xf32> to vector<16x4xf32>
      %c0_122 = arith.constant 0 : index
      %c0_123 = arith.constant 0 : index
      %111 = vector.load %arg4[%c0_122, %c0_123] : memref<4x32xf32, #tpu.memory_space<vmem>>, vector<4x32xf32>
      %cst_124 = arith.constant dense<0.000000e+00> : vector<16x32xf32>
      %112 = tpu.matmul %110, %111, %cst_124 {dimension_numbers = #tpu.dot_dimension_numbers<[1], [0], [0], [1], [0, 0, 1, 1], [], []>} : vector<16x4xf32>, vector<4x32xf32>, vector<16x32xf32> -> vector<16x32xf32>
      %c0_125 = arith.constant 0 : index
      %c0_126 = arith.constant 0 : index
      %113 = vector.load %arg7[%c0_125, %c0_126] : memref<16x32xf32, #tpu.memory_space<vmem>>, vector<16x32xf32>
      tpu.vector_store %arg7[%c0_125, %c0_126], %112 {strides = array<i32>} : memref<16x32xf32, #tpu.memory_space<vmem>>, vector<16x32xf32>,
    } else {
    }
    %c0 = arith.constant 0 : index
    %c0_1 = arith.constant 0 : index
    %3 = vector.load %arg3[%c0, %c0_1] : memref<32x4xf32, #tpu.memory_space<vmem>>, vector<32x4xf32>
    %c0_2 = arith.constant 0 : index
    %c0_3 = arith.constant 0 : index
    %4 = vector.load %arg7[%c0_2, %c0_3] : memref<16x32xf32, #tpu.memory_space<vmem>>, vector<4x32xf32>
    %cst = arith.constant dense<0.000000e+00> : vector<32x32xf32>
    %5 = tpu.matmul %3, %4, %cst {dimension_numbers = #tpu.dot_dimension_numbers<[1], [0], [0], [1], [0, 0, 1, 1], [], []>} : vector<32x4xf32>, vector<4x32xf32>, vector<32x32xf32> -> vector<32x32xf32>
    %c0_4 = arith.constant 0 : index
    %c0_5 = arith.constant 0 : index
    %c0_6 = arith.constant 0 : index
    %c0_7 = arith.constant 0 : index
    %6 = vector.load %arg5[%c0_4, %c0_5, %c0_6, %c0_7] : memref<1x4x32x32xf32, #tpu.memory_space<vmem>>, vector<1x1x32x32xf32>
    %7 = vector.shape_cast %6 : vector<1x1x32x32xf32> to vector<32x32xf32>
    %8 = vector.shape_cast %5 : vector<32x32xf32> to vector<1x1x32x32xf32>
    tpu.vector_store %arg5[%c0_4, %c0_5, %c0_6, %c0_7], %8 {strides = array<i32>} : memref<1x4x32x32xf32, #tpu.memory_space<vmem>>, vector<1x1x32x32xf32>,
    %c4 = arith.constant 4 : index
    %c0_8 = arith.constant 0 : index
    %9 = vector.load %arg7[%c4, %c0_8] : memref<16x32xf32, #tpu.memory_space<vmem>>, vector<4x32xf32>
    %cst_9 = arith.constant dense<0.000000e+00> : vector<32x32xf32>
    %10 = tpu.matmul %3, %9, %cst_9 {dimension_numbers = #tpu.dot_dimension_numbers<[1], [0], [0], [1], [0, 0, 1, 1], [], []>} : vector<32x4xf32>, vector<4x32xf32>, vector<32x32xf32> -> vector<32x32xf32>
    %c0_10 = arith.constant 0 : index
    %c1 = arith.constant 1 : index
    %c0_11 = arith.constant 0 : index
    %c0_12 = arith.constant 0 : index
    %11 = vector.load %arg5[%c0_10, %c1, %c0_11, %c0_12] : memref<1x4x32x32xf32, #tpu.memory_space<vmem>>, vector<1x1x32x32xf32>
    %12 = vector.shape_cast %11 : vector<1x1x32x32xf32> to vector<32x32xf32>
    %13 = vector.shape_cast %10 : vector<32x32xf32> to vector<1x1x32x32xf32>
    tpu.vector_store %arg5[%c0_10, %c1, %c0_11, %c0_12], %13 {strides = array<i32>} : memref<1x4x32x32xf32, #tpu.memory_space<vmem>>, vector<1x1x32x32xf32>,
    %14 = arith.maximumf %5, %10 : vector<32x32xf32>
    %c8 = arith.constant 8 : index
    %c0_13 = arith.constant 0 : index
    %15 = vector.load %arg7[%c8, %c0_13] : memref<16x32xf32, #tpu.memory_space<vmem>>, vector<4x32xf32>
    %cst_14 = arith.constant dense<0.000000e+00> : vector<32x32xf32>
    %16 = tpu.matmul %3, %15, %cst_14 {dimension_numbers = #tpu.dot_dimension_numbers<[1], [0], [0], [1], [0, 0, 1, 1], [], []>} : vector<32x4xf32>, vector<4x32xf32>, vector<32x32xf32> -> vector<32x32xf32>
    %c0_15 = arith.constant 0 : index
    %c2 = arith.constant 2 : index
    %c0_16 = arith.constant 0 : index
    %c0_17 = arith.constant 0 : index
    %17 = vector.load %arg5[%c0_15, %c2, %c0_16, %c0_17] : memref<1x4x32x32xf32, #tpu.memory_space<vmem>>, vector<1x1x32x32xf32>
    %18 = vector.shape_cast %17 : vector<1x1x32x32xf32> to vector<32x32xf32>
    %19 = vector.shape_cast %16 : vector<32x32xf32> to vector<1x1x32x32xf32>
    tpu.vector_store %arg5[%c0_15, %c2, %c0_16, %c0_17], %19 {strides = array<i32>} : memref<1x4x32x32xf32, #tpu.memory_space<vmem>>, vector<1x1x32x32xf32>,
    %20 = arith.maximumf %14, %16 : vector<32x32xf32>
    %c12 = arith.constant 12 : index
    %c0_18 = arith.constant 0 : index
    %21 = vector.load %arg7[%c12, %c0_18] : memref<16x32xf32, #tpu.memory_space<vmem>>, vector<4x32xf32>
    %cst_19 = arith.constant dense<0.000000e+00> : vector<32x32xf32>
    %22 = tpu.matmul %3, %21, %cst_19 {dimension_numbers = #tpu.dot_dimension_numbers<[1], [0], [0], [1], [0, 0, 1, 1], [], []>} : vector<32x4xf32>, vector<4x32xf32>, vector<32x32xf32> -> vector<32x32xf32>
    %c0_20 = arith.constant 0 : index
    %c3 = arith.constant 3 : index
    %c0_21 = arith.constant 0 : index
    %c0_22 = arith.constant 0 : index
    %23 = vector.load %arg5[%c0_20, %c3, %c0_21, %c0_22] : memref<1x4x32x32xf32, #tpu.memory_space<vmem>>, vector<1x1x32x32xf32>
    %24 = vector.shape_cast %23 : vector<1x1x32x32xf32> to vector<32x32xf32>
    %25 = vector.shape_cast %22 : vector<32x32xf32> to vector<1x1x32x32xf32>
    tpu.vector_store %arg5[%c0_20, %c3, %c0_21, %c0_22], %25 {strides = array<i32>} : memref<1x4x32x32xf32, #tpu.memory_space<vmem>>, vector<1x1x32x32xf32>,
    %26 = arith.maximumf %20, %22 : vector<32x32xf32>
    %c0_23 = arith.constant 0 : index
    %c0_24 = arith.constant 0 : index
    %c0_25 = arith.constant 0 : index
    %c0_26 = arith.constant 0 : index
    %27 = vector.load %arg5[%c0_23, %c0_24, %c0_25, %c0_26] : memref<1x4x32x32xf32, #tpu.memory_space<vmem>>, vector<1x1x32x32xf32>
    %28 = vector.shape_cast %27 : vector<1x1x32x32xf32> to vector<32x32xf32>
    %29 = arith.subf %28, %26 : vector<32x32xf32>
    %30 = math.exp %29 : vector<32x32xf32>
    %c0_27 = arith.constant 0 : index
    %c0_28 = arith.constant 0 : index
    %c0_29 = arith.constant 0 : index
    %c0_30 = arith.constant 0 : index
    %31 = vector.load %arg6[%c0_27, %c0_28, %c0_29, %c0_30] : memref<1x4x32x32xf32, #tpu.memory_space<vmem>>, vector<1x1x32x32xf32>
    %32 = vector.shape_cast %31 : vector<1x1x32x32xf32> to vector<32x32xf32>
    %33 = vector.shape_cast %30 : vector<32x32xf32> to vector<1x1x32x32xf32>
    tpu.vector_store %arg6[%c0_27, %c0_28, %c0_29, %c0_30], %33 {strides = array<i32>} : memref<1x4x32x32xf32, #tpu.memory_space<vmem>>, vector<1x1x32x32xf32>,
    %c0_31 = arith.constant 0 : index
    %c1_32 = arith.constant 1 : index
    %c0_33 = arith.constant 0 : index
    %c0_34 = arith.constant 0 : index
    %34 = vector.load %arg5[%c0_31, %c1_32, %c0_33, %c0_34] : memref<1x4x32x32xf32, #tpu.memory_space<vmem>>, vector<1x1x32x32xf32>
    %35 = vector.shape_cast %34 : vector<1x1x32x32xf32> to vector<32x32xf32>
    %36 = arith.subf %35, %26 : vector<32x32xf32>
    %37 = math.exp %36 : vector<32x32xf32>
    %c0_35 = arith.constant 0 : index
    %c1_36 = arith.constant 1 : index
    %c0_37 = arith.constant 0 : index
    %c0_38 = arith.constant 0 : index
    %38 = vector.load %arg6[%c0_35, %c1_36, %c0_37, %c0_38] : memref<1x4x32x32xf32, #tpu.memory_space<vmem>>, vector<1x1x32x32xf32>
    %39 = vector.shape_cast %38 : vector<1x1x32x32xf32> to vector<32x32xf32>
    %40 = vector.shape_cast %37 : vector<32x32xf32> to vector<1x1x32x32xf32>
    tpu.vector_store %arg6[%c0_35, %c1_36, %c0_37, %c0_38], %40 {strides = array<i32>} : memref<1x4x32x32xf32, #tpu.memory_space<vmem>>, vector<1x1x32x32xf32>,
    %41 = arith.addf %30, %37 : vector<32x32xf32>
    %c0_39 = arith.constant 0 : index
    %c2_40 = arith.constant 2 : index
    %c0_41 = arith.constant 0 : index
    %c0_42 = arith.constant 0 : index
    %42 = vector.load %arg5[%c0_39, %c2_40, %c0_41, %c0_42] : memref<1x4x32x32xf32, #tpu.memory_space<vmem>>, vector<1x1x32x32xf32>
    %43 = vector.shape_cast %42 : vector<1x1x32x32xf32> to vector<32x32xf32>
    %44 = arith.subf %43, %26 : vector<32x32xf32>
    %45 = math.exp %44 : vector<32x32xf32>
    %c0_43 = arith.constant 0 : index
    %c2_44 = arith.constant 2 : index
    %c0_45 = arith.constant 0 : index
    %c0_46 = arith.constant 0 : index
    %46 = vector.load %arg6[%c0_43, %c2_44, %c0_45, %c0_46] : memref<1x4x32x32xf32, #tpu.memory_space<vmem>>, vector<1x1x32x32xf32>
    %47 = vector.shape_cast %46 : vector<1x1x32x32xf32> to vector<32x32xf32>
    %48 = vector.shape_cast %45 : vector<32x32xf32> to vector<1x1x32x32xf32>
    tpu.vector_store %arg6[%c0_43, %c2_44, %c0_45, %c0_46], %48 {strides = array<i32>} : memref<1x4x32x32xf32, #tpu.memory_space<vmem>>, vector<1x1x32x32xf32>,
    %49 = arith.addf %41, %45 : vector<32x32xf32>
    %c0_47 = arith.constant 0 : index
    %c3_48 = arith.constant 3 : index
    %c0_49 = arith.constant 0 : index
    %c0_50 = arith.constant 0 : index
    %50 = vector.load %arg5[%c0_47, %c3_48, %c0_49, %c0_50] : memref<1x4x32x32xf32, #tpu.memory_space<vmem>>, vector<1x1x32x32xf32>
    %51 = vector.shape_cast %50 : vector<1x1x32x32xf32> to vector<32x32xf32>
    %52 = arith.subf %51, %26 : vector<32x32xf32>
    %53 = math.exp %52 : vector<32x32xf32>
    %c0_51 = arith.constant 0 : index
    %c3_52 = arith.constant 3 : index
    %c0_53 = arith.constant 0 : index
    %c0_54 = arith.constant 0 : index
    %54 = vector.load %arg6[%c0_51, %c3_52, %c0_53, %c0_54] : memref<1x4x32x32xf32, #tpu.memory_space<vmem>>, vector<1x1x32x32xf32>
    %55 = vector.shape_cast %54 : vector<1x1x32x32xf32> to vector<32x32xf32>
    %56 = vector.shape_cast %53 : vector<32x32xf32> to vector<1x1x32x32xf32>
    tpu.vector_store %arg6[%c0_51, %c3_52, %c0_53, %c0_54], %56 {strides = array<i32>} : memref<1x4x32x32xf32, #tpu.memory_space<vmem>>, vector<1x1x32x32xf32>,
    %57 = arith.addf %49, %53 : vector<32x32xf32>
    %58 = tpu.reciprocal %57 : vector<32x32xf32> -> vector<32x32xf32>
    %59 = math.log %57 : vector<32x32xf32>
    %60 = arith.addf %26, %59 : vector<32x32xf32>
    %c0_55 = arith.constant 0 : index
    %c0_56 = arith.constant 0 : index
    %c0_57 = arith.constant 0 : index
    %c0_58 = arith.constant 0 : index
    %61 = vector.load %arg6[%c0_55, %c0_56, %c0_57, %c0_58] : memref<1x4x32x32xf32, #tpu.memory_space<vmem>>, vector<1x1x32x32xf32>
    %62 = vector.shape_cast %61 : vector<1x1x32x32xf32> to vector<32x32xf32>
    %63 = arith.mulf %62, %58 : vector<32x32xf32>
    %c0_59 = arith.constant 0 : index
    %c0_60 = arith.constant 0 : index
    %c0_61 = arith.constant 0 : index
    %c0_62 = arith.constant 0 : index
    %64 = vector.load %arg6[%c0_59, %c0_60, %c0_61, %c0_62] : memref<1x4x32x32xf32, #tpu.memory_space<vmem>>, vector<1x1x32x32xf32>
    %65 = vector.shape_cast %64 : vector<1x1x32x32xf32> to vector<32x32xf32>
    %66 = vector.shape_cast %63 : vector<32x32xf32> to vector<1x1x32x32xf32>
    tpu.vector_store %arg6[%c0_59, %c0_60, %c0_61, %c0_62], %66 {strides = array<i32>} : memref<1x4x32x32xf32, #tpu.memory_space<vmem>>, vector<1x1x32x32xf32>,
    %c0_63 = arith.constant 0 : index
    %c0_64 = arith.constant 0 : index
    %c0_65 = arith.constant 0 : index
    %c0_66 = arith.constant 0 : index
    %67 = vector.load %arg5[%c0_63, %c0_64, %c0_65, %c0_66] : memref<1x4x32x32xf32, #tpu.memory_space<vmem>>, vector<1x1x32x32xf32>
    %68 = vector.shape_cast %67 : vector<1x1x32x32xf32> to vector<32x32xf32>
    %69 = arith.subf %68, %60 : vector<32x32xf32>
    %c0_67 = arith.constant 0 : index
    %c0_68 = arith.constant 0 : index
    %c0_69 = arith.constant 0 : index
    %c0_70 = arith.constant 0 : index
    %70 = vector.load %arg5[%c0_67, %c0_68, %c0_69, %c0_70] : memref<1x4x32x32xf32, #tpu.memory_space<vmem>>, vector<1x1x32x32xf32>
    %71 = vector.shape_cast %70 : vector<1x1x32x32xf32> to vector<32x32xf32>
    %72 = vector.shape_cast %69 : vector<32x32xf32> to vector<1x1x32x32xf32>
    tpu.vector_store %arg5[%c0_67, %c0_68, %c0_69, %c0_70], %72 {strides = array<i32>} : memref<1x4x32x32xf32, #tpu.memory_space<vmem>>, vector<1x1x32x32xf32>,
    %c0_71 = arith.constant 0 : index
    %c1_72 = arith.constant 1 : index
    %c0_73 = arith.constant 0 : index
    %c0_74 = arith.constant 0 : index
    %73 = vector.load %arg6[%c0_71, %c1_72, %c0_73, %c0_74] : memref<1x4x32x32xf32, #tpu.memory_space<vmem>>, vector<1x1x32x32xf32>
    %74 = vector.shape_cast %73 : vector<1x1x32x32xf32> to vector<32x32xf32>
    %75 = arith.mulf %74, %58 : vector<32x32xf32>
    %c0_75 = arith.constant 0 : index
    %c1_76 = arith.constant 1 : index
    %c0_77 = arith.constant 0 : index
    %c0_78 = arith.constant 0 : index
    %76 = vector.load %arg6[%c0_75, %c1_76, %c0_77, %c0_78] : memref<1x4x32x32xf32, #tpu.memory_space<vmem>>, vector<1x1x32x32xf32>
    %77 = vector.shape_cast %76 : vector<1x1x32x32xf32> to vector<32x32xf32>
    %78 = vector.shape_cast %75 : vector<32x32xf32> to vector<1x1x32x32xf32>
    tpu.vector_store %arg6[%c0_75, %c1_76, %c0_77, %c0_78], %78 {strides = array<i32>} : memref<1x4x32x32xf32, #tpu.memory_space<vmem>>, vector<1x1x32x32xf32>,
    %c0_79 = arith.constant 0 : index
    %c1_80 = arith.constant 1 : index
    %c0_81 = arith.constant 0 : index
    %c0_82 = arith.constant 0 : index
    %79 = vector.load %arg5[%c0_79, %c1_80, %c0_81, %c0_82] : memref<1x4x32x32xf32, #tpu.memory_space<vmem>>, vector<1x1x32x32xf32>
    %80 = vector.shape_cast %79 : vector<1x1x32x32xf32> to vector<32x32xf32>
    %81 = arith.subf %80, %60 : vector<32x32xf32>
    %c0_83 = arith.constant 0 : index
    %c1_84 = arith.constant 1 : index
    %c0_85 = arith.constant 0 : index
    %c0_86 = arith.constant 0 : index
    %82 = vector.load %arg5[%c0_83, %c1_84, %c0_85, %c0_86] : memref<1x4x32x32xf32, #tpu.memory_space<vmem>>, vector<1x1x32x32xf32>
    %83 = vector.shape_cast %82 : vector<1x1x32x32xf32> to vector<32x32xf32>
    %84 = vector.shape_cast %81 : vector<32x32xf32> to vector<1x1x32x32xf32>
    tpu.vector_store %arg5[%c0_83, %c1_84, %c0_85, %c0_86], %84 {strides = array<i32>} : memref<1x4x32x32xf32, #tpu.memory_space<vmem>>, vector<1x1x32x32xf32>,
    %c0_87 = arith.constant 0 : index
    %c2_88 = arith.constant 2 : index
    %c0_89 = arith.constant 0 : index
    %c0_90 = arith.constant 0 : index
    %85 = vector.load %arg6[%c0_87, %c2_88, %c0_89, %c0_90] : memref<1x4x32x32xf32, #tpu.memory_space<vmem>>, vector<1x1x32x32xf32>
    %86 = vector.shape_cast %85 : vector<1x1x32x32xf32> to vector<32x32xf32>
    %87 = arith.mulf %86, %58 : vector<32x32xf32>
    %c0_91 = arith.constant 0 : index
    %c2_92 = arith.constant 2 : index
    %c0_93 = arith.constant 0 : index
    %c0_94 = arith.constant 0 : index
    %88 = vector.load %arg6[%c0_91, %c2_92, %c0_93, %c0_94] : memref<1x4x32x32xf32, #tpu.memory_space<vmem>>, vector<1x1x32x32xf32>
    %89 = vector.shape_cast %88 : vector<1x1x32x32xf32> to vector<32x32xf32>
    %90 = vector.shape_cast %87 : vector<32x32xf32> to vector<1x1x32x32xf32>
    tpu.vector_store %arg6[%c0_91, %c2_92, %c0_93, %c0_94], %90 {strides = array<i32>} : memref<1x4x32x32xf32, #tpu.memory_space<vmem>>, vector<1x1x32x32xf32>,
    %c0_95 = arith.constant 0 : index
    %c2_96 = arith.constant 2 : index
    %c0_97 = arith.constant 0 : index
    %c0_98 = arith.constant 0 : index
    %91 = vector.load %arg5[%c0_95, %c2_96, %c0_97, %c0_98] : memref<1x4x32x32xf32, #tpu.memory_space<vmem>>, vector<1x1x32x32xf32>
    %92 = vector.shape_cast %91 : vector<1x1x32x32xf32> to vector<32x32xf32>
    %93 = arith.subf %92, %60 : vector<32x32xf32>
    %c0_99 = arith.constant 0 : index
    %c2_100 = arith.constant 2 : index
    %c0_101 = arith.constant 0 : index
    %c0_102 = arith.constant 0 : index
    %94 = vector.load %arg5[%c0_99, %c2_100, %c0_101, %c0_102] : memref<1x4x32x32xf32, #tpu.memory_space<vmem>>, vector<1x1x32x32xf32>
    %95 = vector.shape_cast %94 : vector<1x1x32x32xf32> to vector<32x32xf32>
    %96 = vector.shape_cast %93 : vector<32x32xf32> to vector<1x1x32x32xf32>
    tpu.vector_store %arg5[%c0_99, %c2_100, %c0_101, %c0_102], %96 {strides = array<i32>} : memref<1x4x32x32xf32, #tpu.memory_space<vmem>>, vector<1x1x32x32xf32>,
    %c0_103 = arith.constant 0 : index
    %c3_104 = arith.constant 3 : index
    %c0_105 = arith.constant 0 : index
    %c0_106 = arith.constant 0 : index
    %97 = vector.load %arg6[%c0_103, %c3_104, %c0_105, %c0_106] : memref<1x4x32x32xf32, #tpu.memory_space<vmem>>, vector<1x1x32x32xf32>
    %98 = vector.shape_cast %97 : vector<1x1x32x32xf32> to vector<32x32xf32>
    %99 = arith.mulf %98, %58 : vector<32x32xf32>
    %c0_107 = arith.constant 0 : index
    %c3_108 = arith.constant 3 : index
    %c0_109 = arith.constant 0 : index
    %c0_110 = arith.constant 0 : index
    %100 = vector.load %arg6[%c0_107, %c3_108, %c0_109, %c0_110] : memref<1x4x32x32xf32, #tpu.memory_space<vmem>>, vector<1x1x32x32xf32>
    %101 = vector.shape_cast %100 : vector<1x1x32x32xf32> to vector<32x32xf32>
    %102 = vector.shape_cast %99 : vector<32x32xf32> to vector<1x1x32x32xf32>
    tpu.vector_store %arg6[%c0_107, %c3_108, %c0_109, %c0_110], %102 {strides = array<i32>} : memref<1x4x32x32xf32, #tpu.memory_space<vmem>>, vector<1x1x32x32xf32>,
    %c0_111 = arith.constant 0 : index
    %c3_112 = arith.constant 3 : index
    %c0_113 = arith.constant 0 : index
    %c0_114 = arith.constant 0 : index
    %103 = vector.load %arg5[%c0_111, %c3_112, %c0_113, %c0_114] : memref<1x4x32x32xf32, #tpu.memory_space<vmem>>, vector<1x1x32x32xf32>
    %104 = vector.shape_cast %103 : vector<1x1x32x32xf32> to vector<32x32xf32>
    %105 = arith.subf %104, %60 : vector<32x32xf32>
    %c0_115 = arith.constant 0 : index
    %c3_116 = arith.constant 3 : index
    %c0_117 = arith.constant 0 : index
    %c0_118 = arith.constant 0 : index
    %106 = vector.load %arg5[%c0_115, %c3_116, %c0_117, %c0_118] : memref<1x4x32x32xf32, #tpu.memory_space<vmem>>, vector<1x1x32x32xf32>
    %107 = vector.shape_cast %106 : vector<1x1x32x32xf32> to vector<32x32xf32>
    %108 = vector.shape_cast %105 : vector<32x32xf32> to vector<1x1x32x32xf32>
    tpu.vector_store %arg5[%c0_115, %c3_116, %c0_117, %c0_118], %108 {strides = array<i32>} : memref<1x4x32x32xf32, #tpu.memory_space<vmem>>, vector<1x1x32x32xf32>,
    return
  }
  func.func @transform_0(%arg0: i32, %arg1: i32) -> (i32, i32, i32) {
    %c0_i32 = arith.constant 0 : i32
    %c0_i32_0 = arith.constant 0 : i32
    %c0_i32_1 = arith.constant 0 : i32
    return %arg0, %c0_i32, %c0_i32_0 : i32, i32, i32
  }
  func.func @transform_1(%arg0: i32, %arg1: i32) -> (i32, i32) {
    %c0_i32 = arith.constant 0 : i32
    %c0_i32_0 = arith.constant 0 : i32
    return %arg1, %c0_i32 : i32, i32
  }
  func.func @transform_2(%arg0: i32, %arg1: i32) -> (i32, i32) {
    %c0_i32 = arith.constant 0 : i32
    %c0_i32_0 = arith.constant 0 : i32
    %c0_i32_1 = arith.constant 0 : i32
    return %c0_i32, %c0_i32_0 : i32, i32
  }
  func.func @transform_3(%arg0: i32, %arg1: i32) -> (i32, i32, i32, i32) {
    %c0_i32 = arith.constant 0 : i32
    %c0_i32_0 = arith.constant 0 : i32
    %c0_i32_1 = arith.constant 0 : i32
    return %arg0, %c0_i32, %arg1, %c0_i32_0 : i32, i32, i32, i32
  }
  func.func @transform_4(%arg0: i32, %arg1: i32) -> (i32, i32, i32, i32) {
    %c0_i32 = arith.constant 0 : i32
    %c0_i32_0 = arith.constant 0 : i32
    %c0_i32_1 = arith.constant 0 : i32
    return %arg0, %c0_i32, %arg1, %c0_i32_0 : i32, i32, i32, i32
  }
}

</mosaic_0001>

<llo_original>
// kernel: drnseg_forward.2
$region0: #{drnseg_forward.2}
  #allocation0 [shape = 'u32[]', space=smem, size = 0x4, offset = 0x4, fixed_abs, tag = 'smem constant byte address 0x4 - core index']
  #allocation1 [shape = 'u32[144,128]{1,0:T(1,128)}', space=vmem, size = 0x12000, scoped, tag = 'internal scratch']
  %s0 = inlined_call_operand.vmem [shape: bf16[2,192,16], index: 0, kind: input, shape index: {}]
  %s1 = inlined_call_operand.vmem [shape: bf16[32,192], index: 1, kind: input, shape index: {}]
  %s2 = inlined_call_operand.vmem [shape: f32[32,1], index: 2, kind: input, shape index: {}]
  %s3 = inlined_call_operand.vmem [shape: f32[4,32], index: 3, kind: input, shape index: {}]
  %s4 = inlined_call_operand.vmem [shape: f32[4,1], index: 4, kind: input, shape index: {}]
  %s5 = inlined_call_operand.vmem [shape: f32[2,4,16], index: 5, kind: output, shape index: {}]
  %s6 = sld [smem:[#allocation0]]
  $region53: #{drnseg_forward.2} parent=0
    _
  %s8 = ssub.s32 1, %s6
  %s9 = scalar_select 0, %s8, %s6
  loop: start=0, step=1, limit=4
  $region2: #{drnseg_forward.2} parent=0 // loop_pre_header
    _
  $region3: #{drnseg_forward.2} parent=0 // loop_header
    %s11 = sphi 0, %s15
    %p12 = scmp.ge.s32.totalorder %s11, 4
    %s18 = sphi 0, %s30
    %s19 = sphi 0, %s26
    %s20 = sphi 0, %s18
    %s21 = sphi 0, %s19
    %s22 = sphi 0, %s20
    %s23 = sphi 0, %s21
    %s35 = sphi 0, %s37
    %s38 = sphi 0, %s35
    %s39 = sphi 0, %s38
    %s55 = sphi 0, %s39
    %s59 = sphi 0, %s59
    %s61 = sphi 0, %s59
    %s62 = sphi 0, %s61
    %s76 = sphi 0, %s62
    %s80 = sphi 0, %s80
    %s82 = sphi 0, %s80
    %s83 = sphi 0, %s82
    %s97 = sphi 0, %s83
    %s101 = sphi 0, %s101
    %s103 = sphi 0, %s101
    %s104 = sphi 0, %s103
    %s118 = sphi 0, %s104
    %s122 = sphi 0, %s122
    %s124 = sphi 0, %s122
    %s125 = sphi 0, %s124
    %s139 = sphi 0, %s125
    %s147 = sphi 0, %s149
    %s150 = sphi 0, %s147
    %s151 = sphi 0, %s150
    %s167 = sphi 0, %s151
  $region4: #{drnseg_forward.2} parent=0 // loop_header_branch
    %14 = sbr.rel (%p12) target = $region8
  $region5: #{drnseg_forward.2} parent=0 // loop_body
    %s16 = ssub.s32 %s11, 1
    %s17 = ssub.s32 %s11, 2
    %s24 = sadd.s32 1, %s19
    %p25 = scmp.ge.s32.totalorder %s24, 1
    %s26 = scalar_select %p25, 0, %s24
    %s27 = sadd.s32 1, %s18
    %s28 = scalar_select %p25, %s27, %s18
    %p29 = scmp.ge.s32.totalorder %s28, 2
    %s30 = scalar_select %p29, 0, %s28
    %s31 = ssub.s32 %s18, %s30
    %s32 = ssub.s32 %s19, %s26
    %s33 = sor.u32 %s31, %s32
    %p34 = scmp.eq.s32.totalorder %s33, 0
    %s36 = sadd.s32 %s35, 1
    %s37 = scalar_select %p34, %s35, %s36
    %p40 = pneg %p34
    %p41 = scmp.eq.s32.totalorder %s11, 1
    %p42 = por %p40, %p41
    %p43 = scmp.ne.s32.totalorder %s35, %s38
    %p44 = scmp.eq.s32.totalorder %s11, 0
    %p45 = por %p43, %p44
    %p46 = scmp.ne.s32.totalorder %s35, %s38
    %p47 = scmp.eq.s32.totalorder %s16, 1
    %p48 = por %p46, %p47
    %p49 = scmp.ne.s32.totalorder %s38, %s39
    %p50 = scmp.eq.s32.totalorder %s16, 0
    %p51 = por %p49, %p50
    %p52 = scmp.ne.s32.totalorder %s38, %s39
    %p53 = scmp.eq.s32.totalorder %s17, 1
    %p54 = por %p52, %p53
    %p56 = scmp.ne.s32.totalorder %s39, %s55
    %p57 = scmp.eq.s32.totalorder %s17, 0
    %p58 = por %p56, %p57
    %s60 = sadd.s32 %s59, 1
    %p63 = scmp.eq.s32.totalorder %s11, 1
    %p64 = scmp.ne.s32.totalorder %s59, %s61
    %p65 = scmp.eq.s32.totalorder %s11, 0
    %p66 = por %p64, %p65
    %p67 = scmp.ne.s32.totalorder %s59, %s61
    %p68 = scmp.eq.s32.totalorder %s16, 1
    %p69 = por %p67, %p68
    %p70 = scmp.ne.s32.totalorder %s61, %s62
    %p71 = scmp.eq.s32.totalorder %s16, 0
    %p72 = por %p70, %p71
    %p73 = scmp.ne.s32.totalorder %s61, %s62
    %p74 = scmp.eq.s32.totalorder %s17, 1
    %p75 = por %p73, %p74
    %p77 = scmp.ne.s32.totalorder %s62, %s76
    %p78 = scmp.eq.s32.totalorder %s17, 0
    %p79 = por %p77, %p78
    %s81 = sadd.s32 %s80, 1
    %p84 = scmp.eq.s32.totalorder %s11, 1
    %p85 = scmp.ne.s32.totalorder %s80, %s82
    %p86 = scmp.eq.s32.totalorder %s11, 0
    %p87 = por %p85, %p86
    %p88 = scmp.ne.s32.totalorder %s80, %s82
    %p89 = scmp.eq.s32.totalorder %s16, 1
    %p90 = por %p88, %p89
    %p91 = scmp.ne.s32.totalorder %s82, %s83
    %p92 = scmp.eq.s32.totalorder %s16, 0
    %p93 = por %p91, %p92
    %p94 = scmp.ne.s32.totalorder %s82, %s83
    %p95 = scmp.eq.s32.totalorder %s17, 1
    %p96 = por %p94, %p95
    %p98 = scmp.ne.s32.totalorder %s83, %s97
    %p99 = scmp.eq.s32.totalorder %s17, 0
    %p100 = por %p98, %p99
    %s102 = sadd.s32 %s101, 1
    %p105 = scmp.eq.s32.totalorder %s11, 1
    %p106 = scmp.ne.s32.totalorder %s101, %s103
    %p107 = scmp.eq.s32.totalorder %s11, 0
    %p108 = por %p106, %p107
    %p109 = scmp.ne.s32.totalorder %s101, %s103
    %p110 = scmp.eq.s32.totalorder %s16, 1
    %p111 = por %p109, %p110
    %p112 = scmp.ne.s32.totalorder %s103, %s104
    %p113 = scmp.eq.s32.totalorder %s16, 0
    %p114 = por %p112, %p113
    %p115 = scmp.ne.s32.totalorder %s103, %s104
    %p116 = scmp.eq.s32.totalorder %s17, 1
    %p117 = por %p115, %p116
    %p119 = scmp.ne.s32.totalorder %s104, %s118
    %p120 = scmp.eq.s32.totalorder %s17, 0
    %p121 = por %p119, %p120
    %s123 = sadd.s32 %s122, 1
    %p126 = scmp.eq.s32.totalorder %s11, 1
    %p127 = scmp.ne.s32.totalorder %s122, %s124
    %p128 = scmp.eq.s32.totalorder %s11, 0
    %p129 = por %p127, %p128
    %p130 = scmp.ne.s32.totalorder %s122, %s124
    %p131 = scmp.eq.s32.totalorder %s16, 1
    %p132 = por %p130, %p131
    %p133 = scmp.ne.s32.totalorder %s124, %s125
    %p134 = scmp.eq.s32.totalorder %s16, 0
    %p135 = por %p133, %p134
    %p136 = scmp.ne.s32.totalorder %s124, %s125
    %p137 = scmp.eq.s32.totalorder %s17, 1
    %p138 = por %p136, %p137
    %p140 = scmp.ne.s32.totalorder %s125, %s139
    %p141 = scmp.eq.s32.totalorder %s17, 0
    %p142 = por %p140, %p141
    %s143 = ssub.s32 %s18, %s30
    %s144 = ssub.s32 %s19, %s26
    %s145 = sor.u32 %s143, %s144
    %p146 = scmp.eq.s32.totalorder %s145, 0
    %s148 = sadd.s32 %s147, 1
    %s149 = scalar_select %p146, %s147, %s148
    %p152 = pneg %p146
    %p153 = scmp.eq.s32.totalorder %s11, 1
    %p154 = por %p152, %p153
    %p155 = scmp.ne.s32.totalorder %s147, %s150
    %p156 = scmp.eq.s32.totalorder %s11, 0
    %p157 = por %p155, %p156
    %p158 = scmp.ne.s32.totalorder %s147, %s150
    %p159 = scmp.eq.s32.totalorder %s16, 1
    %p160 = por %p158, %p159
    %p161 = scmp.ne.s32.totalorder %s150, %s151
    %p162 = scmp.eq.s32.totalorder %s16, 0
    %p163 = por %p161, %p162
    %p164 = scmp.ne.s32.totalorder %s150, %s151
    %p165 = scmp.eq.s32.totalorder %s17, 1
    %p166 = por %p164, %p165
    %p168 = scmp.ne.s32.totalorder %s151, %s167
    %p169 = scmp.eq.s32.totalorder %s17, 0
    %p170 = por %p168, %p169
    %p171 = scmp.le.s32.totalorder 1, %s11
    %p172 = scmp.lt.s32.totalorder %s11, 3
    %p173 = pnand %p171, %p172
    %p174 = pneg %p173
    // Predicated region
    $region9: #{drnseg_forward.2} parent=5 // pred_check
      _
    $region10: #{drnseg_forward.2} parent=5 // pred_check_branch
      %176 = sbr.rel (%p173) target = $region12
    $region11: #{drnseg_forward.2} parent=5 // pred_region
      %s177 = ssub.s32 %s11, 1
      // Predicated region
      $region13: #{drnseg_forward.2} parent=11 // pred_check
        %p178 = pneg %p72
      $region14: #{drnseg_forward.2} parent=11 // pred_check_branch
        %180 = sbr.rel (%p178) target = $region16
      $region15: #{drnseg_forward.2} parent=11 // pred_region
        _
      $region16: #{drnseg_forward.2} parent=11 // pred_fallthru
        _
      // Predicated region
      $region17: #{drnseg_forward.2} parent=11 // pred_check
        %p181 = pneg %p93
      $region18: #{drnseg_forward.2} parent=11 // pred_check_branch
        %183 = sbr.rel (%p181) target = $region20
      $region19: #{drnseg_forward.2} parent=11 // pred_region
        _
      $region20: #{drnseg_forward.2} parent=11 // pred_fallthru
        _
      // Predicated region
      $region21: #{drnseg_forward.2} parent=11 // pred_check
        %p184 = pneg %p114
      $region22: #{drnseg_forward.2} parent=11 // pred_check_branch
        %186 = sbr.rel (%p184) target = $region24
      $region23: #{drnseg_forward.2} parent=11 // pred_region
        _
      $region24: #{drnseg_forward.2} parent=11 // pred_fallthru
        _
      // Predicated region
      $region25: #{drnseg_forward.2} parent=11 // pred_check
        %p187 = pneg %p135
      $region26: #{drnseg_forward.2} parent=11 // pred_check_branch
        %189 = sbr.rel (%p187) target = $region28
      $region27: #{drnseg_forward.2} parent=11 // pred_region
        _
      $region28: #{drnseg_forward.2} parent=11 // pred_fallthru
        _
    $region12: #{drnseg_forward.2} parent=5 // pred_fallthru
      _
    %p190 = scmp.lt.s32.totalorder %s11, 2
    // Predicated region
    $region29: #{drnseg_forward.2} parent=5 // pred_check
      %p191 = pneg %p190
    $region30: #{drnseg_forward.2} parent=5 // pred_check_branch
      %193 = sbr.rel (%p191) target = $region32
    $region31: #{drnseg_forward.2} parent=5 // pred_region
      // Predicated region
      $region33: #{drnseg_forward.2} parent=31 // pred_check
        %p194 = pneg %p45
      $region34: #{drnseg_forward.2} parent=31 // pred_check_branch
        %196 = sbr.rel (%p194) target = $region36
      $region35: #{drnseg_forward.2} parent=31 // pred_region
        %p197 = scmp.lt.s32.totalorder %s18, 1
        %s198 = scalar_select %p197, %s18, 1
        %p199 = scmp.lt.s32.totalorder %s19, 0
        %s200 = scalar_select %p199, %s19, 0
        %s201 = smul.addr %s198, 24
        %s202 = sadd.s32 %s200, %s201
        %s203 = smul.addr %s202, 4
        %s204 = scalar_lea.vmem %s0, %s203
      $region36: #{drnseg_forward.2} parent=31 // pred_fallthru
        _
    $region32: #{drnseg_forward.2} parent=5 // pred_fallthru
      _
    %p205 = scmp.le.s32.totalorder 1, %s11
    %p206 = scmp.lt.s32.totalorder %s11, 3
    %p207 = pnand %p205, %p206
    %p208 = pneg %p207
    // Predicated region
    $region37: #{drnseg_forward.2} parent=5 // pred_check
      _
    $region38: #{drnseg_forward.2} parent=5 // pred_check_branch
      %210 = sbr.rel (%p207) target = $region40
    $region39: #{drnseg_forward.2} parent=5 // pred_region
      %s211 = ssub.s32 %s11, 1
      %p212 = scmp.lt.s32.totalorder %s20, 1
      %s213 = scalar_select %p212, %s20, 1
      %p214 = scmp.lt.s32.totalorder %s21, 0
      %s215 = scalar_select %p214, %s21, 0
      %s216 = smul.addr %s213, 24
      %s217 = sadd.s32 %s215, %s216
      %s218 = smul.addr %s217, 4
      %s219 = scalar_lea.vmem %s0, %s218
      %p220 = pneg %p51
      %p221 = pneg %p48
      %p222 = pneg %p72
      %p223 = pneg %p69
      %p224 = pneg %p93
      %p225 = pneg %p90
      %p226 = pneg %p114
      %p227 = pneg %p111
      %p228 = pneg %p135
      %p229 = pneg %p132
      %p230 = pneg %p163
      %p231 = pneg %p160
      %p232 = scmp.lt.s32.totalorder %s20, 1
      %s233 = scalar_select %p232, %s20, 1
      %p234 = scmp.lt.s32.totalorder %s21, 0
      %s235 = scalar_select %p234, %s21, 0
      %s236 = sadd.s32 %s235, %s233
      %s237 = smul.addr %s236, 4
      %s238 = scalar_lea.vmem %s5, %s237
      %p239 = scmp.lt.s32.totalorder %s20, 1
      %s240 = scalar_select %p239, %s20, 1
      %p241 = scmp.lt.s32.totalorder %s21, 0
      %s242 = scalar_select %p241, %s21, 0
      %s243 = smul.addr %s240, 24
      %s244 = sadd.s32 %s242, %s243
      %s245 = smul.addr %s244, 4
      %s246 = scalar_lea.vmem %s0, %s245
      %p247 = scmp.lt.s32.totalorder %s20, 1
      %s248 = scalar_select %p247, %s20, 1
      %p249 = scmp.lt.s32.totalorder %s21, 0
      %s250 = scalar_select %p249, %s21, 0
      %s251 = sadd.s32 %s250, %s248
      %s252 = smul.addr %s251, 4
      %s253 = scalar_lea.vmem %s5, %s252
      %v255 = vld [vmem:[%s1] sm:$0xff]
      %v256 = vld [vmem:[%s1 + $0x8] sm:$0xff]
      %v257 = vld [vmem:[%s1 + $0x10] sm:$0xff]
      %v258 = vld [vmem:[%s1 + $0x18] sm:$0xff]
      %v259 = vld [vmem:[%s246] sm:$0xf]
      %v260 = vld [vmem:[%s246 + $0x4] sm:$0xf]
      %v261 = vld [vmem:[%s246 + $0x8] sm:$0xf]
      %v262 = vld [vmem:[%s246 + $0xc] sm:$0xf]
      %v263 = vld [vmem:[%s246 + $0x10] sm:$0xf]
      %v264 = vld [vmem:[%s246 + $0x14] sm:$0xf]
      %v265 = vld [vmem:[%s246 + $0x18] sm:$0xf]
      %v266 = vld [vmem:[%s246 + $0x1c] sm:$0xf]
      %v267 = vld [vmem:[%s246 + $0x20] sm:$0xf]
      %v268 = vld [vmem:[%s246 + $0x24] sm:$0xf]
      %v269 = vld [vmem:[%s246 + $0x28] sm:$0xf]
      %v270 = vld [vmem:[%s246 + $0x2c] sm:$0xf]
      %v271 = vld [vmem:[%s246 + $0x30] sm:$0xf]
      %v272 = vld [vmem:[%s246 + $0x34] sm:$0xf]
      %v273 = vld [vmem:[%s246 + $0x38] sm:$0xf]
      %v274 = vld [vmem:[%s246 + $0x3c] sm:$0xf]
      %v275 = vld [vmem:[%s246 + $0x40] sm:$0xf]
      %v276 = vld [vmem:[%s246 + $0x44] sm:$0xf]
      %v277 = vld [vmem:[%s246 + $0x48] sm:$0xf]
      %v278 = vld [vmem:[%s246 + $0x4c] sm:$0xf]
      %v279 = vld [vmem:[%s246 + $0x50] sm:$0xf]
      %v280 = vld [vmem:[%s246 + $0x54] sm:$0xf]
      %v281 = vld [vmem:[%s246 + $0x58] sm:$0xf]
      %v282 = vld [vmem:[%s246 + $0x5c] sm:$0xf]
      %v283 = vld [vmem:[%s2] sm:$0xff]
      %v284 = vld [vmem:[%s2 + $0x8] sm:$0xff]
      %v285 = vld [vmem:[%s2 + $0x10] sm:$0xff]
      %v286 = vld [vmem:[%s2 + $0x18] sm:$0xff]
      %288 = vset.pattern.permute.xlu0 0
      %289 = vperm.xlu0 %288, %v283
      %v290 = vpop.permute.xlu0 %289
      %293 = vset.pattern.permute.xlu0 0
      %294 = vperm.xlu0 %293, %v284
      %v295 = vpop.permute.xlu0 %294
      %298 = vset.pattern.permute.xlu0 0
      %299 = vperm.xlu0 %298, %v285
      %v300 = vpop.permute.xlu0 %299
      %303 = vset.pattern.permute.xlu0 0
      %304 = vperm.xlu0 %303, %v286
      %v305 = vpop.permute.xlu0 %304
      %v311 = vunpack.c.l.b16 %v255
      %v312 = vunpack.c.h.b16 %v255
      %v313 = vunpack.c.l.b16 %v256
      %v314 = vunpack.c.h.b16 %v256
      %v315 = vunpack.c.l.b16 %v257
      %v316 = vunpack.c.h.b16 %v257
      %v317 = vunpack.c.l.b16 %v258
      %v318 = vunpack.c.h.b16 %v258
      %v319 = vpack.c.b16 %v313, %v311
      %v320 = vpack.c.b16 %v314, %v312
      %v321 = vpack.c.b16 %v317, %v315
      %v322 = vpack.c.b16 %v318, %v316
      %v349 = vunpack.c.l.b16 %v259
      %v350 = vunpack.c.l.b16 %v260
      %v351 = vunpack.c.l.b16 %v261
      %v352 = vunpack.c.l.b16 %v262
      %v353 = vunpack.c.l.b16 %v263
      %v354 = vunpack.c.l.b16 %v264
      %v355 = vunpack.c.l.b16 %v265
      %v356 = vunpack.c.l.b16 %v266
      %v357 = vunpack.c.l.b16 %v267
      %v358 = vunpack.c.l.b16 %v268
      %v359 = vunpack.c.l.b16 %v269
      %v360 = vunpack.c.l.b16 %v270
      %v361 = vunpack.c.l.b16 %v271
      %v362 = vunpack.c.l.b16 %v272
      %v363 = vunpack.c.l.b16 %v273
      %v364 = vunpack.c.l.b16 %v274
      %v365 = vunpack.c.l.b16 %v275
      %v366 = vunpack.c.l.b16 %v276
      %v367 = vunpack.c.l.b16 %v277
      %v368 = vunpack.c.l.b16 %v278
      %v369 = vunpack.c.l.b16 %v279
      %v370 = vunpack.c.l.b16 %v280
      %v371 = vunpack.c.l.b16 %v281
      %v372 = vunpack.c.l.b16 %v282
      %v373 = vpack.c.b16 %v350, %v349
      %v374 = vpack.c.b16 %v352, %v351
      %v375 = vpack.c.b16 %v354, %v353
      %v376 = vpack.c.b16 %v356, %v355
      %v377 = vpack.c.b16 %v358, %v357
      %v378 = vpack.c.b16 %v360, %v359
      %v379 = vpack.c.b16 %v362, %v361
      %v380 = vpack.c.b16 %v364, %v363
      %v381 = vpack.c.b16 %v366, %v365
      %v382 = vpack.c.b16 %v368, %v367
      %v383 = vpack.c.b16 %v370, %v369
      %v384 = vpack.c.b16 %v372, %v371
      %vm397 = vcmask 523264
      %v399 = vsel %vm397, %v320, 0
      %v402 = vsel %vm397, %v322, 0
      %404 = vmatprep.subr.bf16.mxu0 0
      %405 = vmatpush1.bf16.msra.mxu0 %v373
      %406 = vmatprep.subr.bf16.mxu0 0
      %407 = vmatpush1.bf16.msra.mxu0 %v374
      %408 = vmatprep.subr.bf16.mxu0 0
      %409 = vmatpush1.bf16.msra.mxu0 %v375
      %410 = vmatprep.subr.bf16.mxu0 0
      %411 = vmatpush1.bf16.msra.mxu0 %v376
      %412 = vmatprep.subr.bf16.mxu0 0
      %413 = vmatpush1.bf16.msra.mxu0 %v377
      %414 = vmatprep.subr.bf16.mxu0 0
      %415 = vmatpush1.bf16.msra.mxu0 %v378
      %416 = vmatprep.subr.bf16.mxu0 0
      %417 = vmatpush1.bf16.msra.mxu0 %v379
      %418 = vmatprep.subr.bf16.mxu0 0
      %419 = vmatpush1.bf16.msra.mxu0 %v380
      %420 = vmatprep.subr.bf16.mxu0 0
      %421 = vmatpush1.bf16.msra.mxu0 %v381
      %422 = vmatprep.subr.bf16.mxu0 0
      %423 = vmatpush1.bf16.msra.mxu0 %v382
      %424 = vmatprep.subr.bf16.mxu0 0
      %425 = vmatpush1.bf16.msra.mxu0 %v383
      %426 = vmatprep.subr.bf16.mxu0 0
      %427 = vmatpush1.bf16.msra.mxu0 %v384
      %428 = vmatprep.subr.bf16.mxu0 0
      %429 = vmatpush1.bf16.msra.mxu0 0
      %430 = vmatprep.subr.bf16.mxu0 0
      %431 = vmatpush1.bf16.msra.mxu0 0
      %432 = vmatprep.subr.bf16.mxu0 0
      %433 = vmatpush1.bf16.msra.mxu0 0
      %434 = vmatprep.subr.bf16.mxu0 0
      %435 = vmatpush1.bf16.msra.mxu0 0
      %436 = vmatprep.mubr.bf16.mxu0 %v399
      %437 = vmatmul.mubr.bf16.gmra.mrb[0].mxu0 %v319
      %v438 = vpop.f32.mrb[0].mxu0
      %v439 = vadd.f32 %v290, %v438
      %v440 = vpop.f32.mrb[0].mxu0
      %v441 = vpop.f32.mrb[0].mxu0
      %v442 = vadd.f32 %v295, %v441
      %v443 = vpop.f32.mrb[0].mxu0
      %444 = vmatprep.mubr.bf16.mxu0 %v402
      %445 = vmatmul.mubr.bf16.gmra.mrb[0].mxu0 %v321
      %v446 = vpop.f32.mrb[0].mxu0
      %v447 = vadd.f32 %v300, %v446
      %v448 = vpop.f32.mrb[0].mxu0
      %v449 = vpop.f32.mrb[0].mxu0
      %v450 = vadd.f32 %v305, %v449
      %v451 = vpop.f32.mrb[0].mxu0
      %452 = vdwg.mxu0
      %v453 = vmax.f32 %v439, 0.0
      %v454 = vmax.f32 %v442, 0.0
      %v455 = vmax.f32 %v447, 0.0
      %v456 = vmax.f32 %v450, 0.0
      %v457 = vld [vmem:[%s3] sm:$0xf]
      %v458 = vld [vmem:[%s4] sm:$0xf]
      %460 = vset.pattern.permute.xlu0 0
      %461 = vperm.xlu0 %460, %v458
      %v462 = vpop.permute.xlu0 %461
      %vm464 = vcmask 261120
      %v466 = vsel %vm464, %v457, 0
      %468 = vmatprep.subr.mxu0 0.0
      %469 = vmatpush1.msra.mxu0 %v453
      %470 = vmatprep.subr.mxu0 0.0
      %471 = vmatpush1.msra.mxu0 %v454
      %472 = vmatprep.subr.mxu0 0.0
      %473 = vmatpush1.msra.mxu0 %v455
      %474 = vmatprep.subr.mxu0 0.0
      %475 = vmatpush1.msra.mxu0 %v456
      %476 = vmatprep.subr.mxu0 0.0
      %477 = vmatpush1.msra.mxu0 0.0
      %478 = vmatprep.subr.mxu0 0.0
      %479 = vmatpush1.msra.mxu0 0.0
      %480 = vmatprep.subr.mxu0 0.0
      %481 = vmatpush1.msra.mxu0 0.0
      %482 = vmatprep.subr.mxu0 0.0
      %483 = vmatpush1.msra.mxu0 0.0
      %484 = vmatprep.subr.mxu0 0.0
      %485 = vmatpush1.msra.mxu0 0.0
      %486 = vmatprep.subr.mxu0 0.0
      %487 = vmatpush1.msra.mxu0 0.0
      %488 = vmatprep.subr.mxu0 0.0
      %489 = vmatpush1.msra.mxu0 0.0
      %490 = vmatprep.subr.mxu0 0.0
      %491 = vmatpush1.msra.mxu0 0.0
      %492 = vmatprep.subr.mxu0 0.0
      %493 = vmatpush1.msra.mxu0 0.0
      %494 = vmatprep.subr.mxu0 0.0
      %495 = vmatpush1.msra.mxu0 0.0
      %496 = vmatprep.subr.mxu0 0.0
      %497 = vmatpush1.msra.mxu0 0.0
      %498 = vmatprep.subr.mxu0 0.0
      %499 = vmatpush1.msra.mxu0 0.0
      %500 = vmatprep.subr.mxu0 0.0
      %501 = vmatpush1.msra.mxu0 0.0
      %502 = vmatprep.subr.mxu0 0.0
      %503 = vmatpush1.msra.mxu0 0.0
      %504 = vmatprep.subr.mxu0 0.0
      %505 = vmatpush1.msra.mxu0 0.0
      %506 = vmatprep.subr.mxu0 0.0
      %507 = vmatpush1.msra.mxu0 0.0
      %508 = vmatprep.subr.mxu0 0.0
      %509 = vmatpush1.msra.mxu0 0.0
      %510 = vmatprep.subr.mxu0 0.0
      %511 = vmatpush1.msra.mxu0 0.0
      %512 = vmatprep.subr.mxu0 0.0
      %513 = vmatpush1.msra.mxu0 0.0
      %514 = vmatprep.subr.mxu0 0.0
      %515 = vmatpush1.msra.mxu0 0.0
      %516 = vmatprep.subr.mxu0 0.0
      %517 = vmatpush1.msra.mxu0 0.0
      %518 = vmatprep.subr.mxu0 0.0
      %519 = vmatpush1.msra.mxu0 0.0
      %520 = vmatprep.subr.mxu0 0.0
      %521 = vmatpush1.msra.mxu0 0.0
      %522 = vmatprep.subr.mxu0 0.0
      %523 = vmatpush1.msra.mxu0 0.0
      %524 = vmatprep.subr.mxu0 0.0
      %525 = vmatpush1.msra.mxu0 0.0
      %526 = vmatprep.subr.mxu0 0.0
      %527 = vmatpush1.msra.mxu0 0.0
      %528 = vmatprep.subr.mxu0 0.0
      %529 = vmatpush1.msra.mxu0 0.0
      %530 = vmatprep.subr.mxu0 0.0
      %531 = vmatpush1.msra.mxu0 0.0
      %532 = vmatprep.mubr.f32.mxu0 0.0
      %533 = vmatmul.mubr.f32.gmra.mrb[0].mxu0 %v466
      %v534 = vpop.f32.mrb[0].mxu0
      %v535 = vadd.f32 %v462, %v534
      %v536 = vpop.f32.mrb[0].mxu0
      %537 = vdwg.mxu0
      %vm538 = vcmask 125952
      %539 = vst.msk [vmem:[%s253] sm:$0xf] %vm538, %v535
      %p540 = scmp.lt.s32.totalorder %s20, 1
      %s541 = scalar_select %p540, %s20, 1
      %p542 = scmp.lt.s32.totalorder %s21, 0
      %s543 = scalar_select %p542, %s21, 0
      %s544 = sadd.s32 %s543, %s541
      %s545 = smul.addr %s544, 4
      %s546 = scalar_lea.vmem %s5, %s545
      // Predicated region
      $region41: #{drnseg_forward.2} parent=39 // pred_check
        %p547 = pneg %p160
      $region42: #{drnseg_forward.2} parent=39 // pred_check_branch
        %549 = sbr.rel (%p547) target = $region44
      $region43: #{drnseg_forward.2} parent=39 // pred_region
        _
      $region44: #{drnseg_forward.2} parent=39 // pred_fallthru
        _
    $region40: #{drnseg_forward.2} parent=5 // pred_fallthru
      _
    %p550 = scmp.le.s32.totalorder 2, %s11
    // Predicated region
    $region45: #{drnseg_forward.2} parent=5 // pred_check
      %p551 = pneg %p550
    $region46: #{drnseg_forward.2} parent=5 // pred_check_branch
      %553 = sbr.rel (%p551) target = $region48
    $region47: #{drnseg_forward.2} parent=5 // pred_region
      %s554 = ssub.s32 %s11, 2
      // Predicated region
      $region49: #{drnseg_forward.2} parent=47 // pred_check
        %p555 = pneg %p166
      $region50: #{drnseg_forward.2} parent=47 // pred_check_branch
        %557 = sbr.rel (%p555) target = $region52
      $region51: #{drnseg_forward.2} parent=47 // pred_region
        %p558 = scmp.lt.s32.totalorder %s22, 1
        %s559 = scalar_select %p558, %s22, 1
        %p560 = scmp.lt.s32.totalorder %s23, 0
        %s561 = scalar_select %p560, %s23, 0
        %s562 = sadd.s32 %s561, %s559
        %s563 = smul.addr %s562, 4
        %s564 = scalar_lea.vmem %s5, %s563
      $region52: #{drnseg_forward.2} parent=47 // pred_fallthru
        _
    $region48: #{drnseg_forward.2} parent=5 // pred_fallthru
      _
  $region6: #{drnseg_forward.2} parent=0 // loop_footer
    %s15 = sadd.s32 1, %s11
  $region7: #{drnseg_forward.2} parent=0 // loop_footer_branch
    %10 = sbr.rel target = $region3
  $region8: #{drnseg_forward.2} parent=0 // loop_exit
    _

// kernel: drnseg_forward.3
$region0: #{drnseg_forward.3}
  #allocation0 [shape = 'u32[]', space=smem, size = 0x4, offset = 0x4, fixed_abs, tag = 'smem constant byte address 0x4 - core index']
  #allocation1 [shape = 'u32[144,128]{1,0:T(1,128)}', space=vmem, size = 0x12000, scoped, tag = 'internal scratch']
  #allocation2 [shape = 'f32[16,32]{1,0:T(8,128)}', space=vmem, size = 0x2000, scoped, tag = 'scratch operand']
  %s0 = inlined_call_operand.vmem [shape: f32[2,16,4], index: 0, kind: input, shape index: {}]
  %s1 = inlined_call_operand.vmem [shape: f32[32,4], index: 1, kind: input, shape index: {}]
  %s2 = inlined_call_operand.vmem [shape: f32[4,32], index: 2, kind: input, shape index: {}]
  %s3 = inlined_call_operand.hbm [shape: f32[2,4,32,32], index: 3, kind: output, shape index: {0}]
  %s4 = inlined_call_operand.hbm [shape: f32[2,4,32,32], index: 4, kind: output, shape index: {1}]
  %5 = xla_tuple %s3, %s4
  %s6 = sld [smem:[#allocation0]]
  $region57: #{drnseg_forward.3} parent=0
    _
  %s8 = ssub.s32 1, %s6
  %s9 = scalar_select 0, %s8, %s6
  $region1: #{drnseg_forward.3} parent=0
    #allocation3 [shape = 'u8[131072]{0}', space=vmem, size = 0x20000, scoped, tag = 'output window, operand 0']
    #allocation4 [shape = 's32[2]{0}', space=sflag, size = 0x8, scoped, tag = 'scoped memory for drnseg_forward.3']
    #allocation5 [shape = 'u8[131072]{0}', space=vmem, size = 0x20000, scoped, tag = 'output window, operand 1']
    #allocation6 [shape = 's32[2]{0}', space=sflag, size = 0x8, scoped, tag = 'scoped memory for drnseg_forward.3']
    %10 = vsyncpa [#allocation4], 0
    %s11 = scalar_lea.sflag [#allocation4], 1
    %12 = vsyncpa %s11, 0
    %13 = vsyncpa [#allocation6], 0
    %s14 = scalar_lea.sflag [#allocation6], 1
    %15 = vsyncpa %s14, 0
    loop: start=0, step=1, limit=4
    $region2: #{drnseg_forward.3} parent=1 // loop_pre_header
      _
    $region3: #{drnseg_forward.3} parent=1 // loop_header
      %s17 = sphi 0, %s21
      %p18 = scmp.ge.s32.totalorder %s17, 4
      %s24 = sphi 0, %s36
      %s25 = sphi 0, %s32
      %s26 = sphi 0, %s24
      %s27 = sphi 0, %s25
      %s28 = sphi 0, %s26
      %s29 = sphi 0, %s27
      %s39 = sphi 0, %s41
      %s42 = sphi 0, %s39
      %s43 = sphi 0, %s42
      %s59 = sphi 0, %s43
      %s65 = sphi 0, %s67
      %s68 = sphi 0, %s65
      %s69 = sphi 0, %s68
      %s85 = sphi 0, %s69
      %s89 = sphi 0, %s89
      %s91 = sphi 0, %s89
      %s92 = sphi 0, %s91
      %s106 = sphi 0, %s92
      %s114 = sphi 0, %s116
      %s117 = sphi 0, %s114
      %s118 = sphi 0, %s117
      %s134 = sphi 0, %s118
      %s142 = sphi 0, %s144
      %s145 = sphi 0, %s142
      %s146 = sphi 0, %s145
      %s162 = sphi 0, %s146
    $region4: #{drnseg_forward.3} parent=1 // loop_header_branch
      %20 = sbr.rel (%p18) target = $region8
    $region5: #{drnseg_forward.3} parent=1 // loop_body
      %s22 = ssub.s32 %s17, 1
      %s23 = ssub.s32 %s17, 2
      %s30 = sadd.s32 1, %s25
      %p31 = scmp.ge.s32.totalorder %s30, 1
      %s32 = scalar_select %p31, 0, %s30
      %s33 = sadd.s32 1, %s24
      %s34 = scalar_select %p31, %s33, %s24
      %p35 = scmp.ge.s32.totalorder %s34, 2
      %s36 = scalar_select %p35, 0, %s34
      %s37 = ssub.s32 %s24, %s36
      %p38 = scmp.eq.s32.totalorder %s37, 0
      %s40 = sadd.s32 %s39, 1
      %s41 = scalar_select %p38, %s39, %s40
      %p44 = pneg %p38
      %p45 = scmp.eq.s32.totalorder %s17, 1
      %p46 = por %p44, %p45
      %p47 = scmp.ne.s32.totalorder %s39, %s42
      %p48 = scmp.eq.s32.totalorder %s17, 0
      %p49 = por %p47, %p48
      %p50 = scmp.ne.s32.totalorder %s39, %s42
      %p51 = scmp.eq.s32.totalorder %s22, 1
      %p52 = por %p50, %p51
      %p53 = scmp.ne.s32.totalorder %s42, %s43
      %p54 = scmp.eq.s32.totalorder %s22, 0
      %p55 = por %p53, %p54
      %p56 = scmp.ne.s32.totalorder %s42, %s43
      %p57 = scmp.eq.s32.totalorder %s23, 1
      %p58 = por %p56, %p57
      %p60 = scmp.ne.s32.totalorder %s43, %s59
      %p61 = scmp.eq.s32.totalorder %s23, 0
      %p62 = por %p60, %p61
      %s63 = ssub.s32 %s25, %s32
      %p64 = scmp.eq.s32.totalorder %s63, 0
      %s66 = sadd.s32 %s65, 1
      %s67 = scalar_select %p64, %s65, %s66
      %p70 = pneg %p64
      %p71 = scmp.eq.s32.totalorder %s17, 1
      %p72 = por %p70, %p71
      %p73 = scmp.ne.s32.totalorder %s65, %s68
      %p74 = scmp.eq.s32.totalorder %s17, 0
      %p75 = por %p73, %p74
      %p76 = scmp.ne.s32.totalorder %s65, %s68
      %p77 = scmp.eq.s32.totalorder %s22, 1
      %p78 = por %p76, %p77
      %p79 = scmp.ne.s32.totalorder %s68, %s69
      %p80 = scmp.eq.s32.totalorder %s22, 0
      %p81 = por %p79, %p80
      %p82 = scmp.ne.s32.totalorder %s68, %s69
      %p83 = scmp.eq.s32.totalorder %s23, 1
      %p84 = por %p82, %p83
      %p86 = scmp.ne.s32.totalorder %s69, %s85
      %p87 = scmp.eq.s32.totalorder %s23, 0
      %p88 = por %p86, %p87
      %s90 = sadd.s32 %s89, 1
      %p93 = scmp.eq.s32.totalorder %s17, 1
      %p94 = scmp.ne.s32.totalorder %s89, %s91
      %p95 = scmp.eq.s32.totalorder %s17, 0
      %p96 = por %p94, %p95
      %p97 = scmp.ne.s32.totalorder %s89, %s91
      %p98 = scmp.eq.s32.totalorder %s22, 1
      %p99 = por %p97, %p98
      %p100 = scmp.ne.s32.totalorder %s91, %s92
      %p101 = scmp.eq.s32.totalorder %s22, 0
      %p102 = por %p100, %p101
      %p103 = scmp.ne.s32.totalorder %s91, %s92
      %p104 = scmp.eq.s32.totalorder %s23, 1
      %p105 = por %p103, %p104
      %p107 = scmp.ne.s32.totalorder %s92, %s106
      %p108 = scmp.eq.s32.totalorder %s23, 0
      %p109 = por %p107, %p108
      %s110 = ssub.s32 %s24, %s36
      %s111 = ssub.s32 %s25, %s32
      %s112 = sor.u32 %s110, %s111
      %p113 = scmp.eq.s32.totalorder %s112, 0
      %s115 = sadd.s32 %s114, 1
      %s116 = scalar_select %p113, %s114, %s115
      %p119 = pneg %p113
      %p120 = scmp.eq.s32.totalorder %s17, 1
      %p121 = por %p119, %p120
      %p122 = scmp.ne.s32.totalorder %s114, %s117
      %p123 = scmp.eq.s32.totalorder %s17, 0
      %p124 = por %p122, %p123
      %p125 = scmp.ne.s32.totalorder %s114, %s117
      %p126 = scmp.eq.s32.totalorder %s22, 1
      %p127 = por %p125, %p126
      %p128 = scmp.ne.s32.totalorder %s117, %s118
      %p129 = scmp.eq.s32.totalorder %s22, 0
      %p130 = por %p128, %p129
      %p131 = scmp.ne.s32.totalorder %s117, %s118
      %p132 = scmp.eq.s32.totalorder %s23, 1
      %p133 = por %p131, %p132
      %p135 = scmp.ne.s32.totalorder %s118, %s134
      %p136 = scmp.eq.s32.totalorder %s23, 0
      %p137 = por %p135, %p136
      %s138 = ssub.s32 %s24, %s36
      %s139 = ssub.s32 %s25, %s32
      %s140 = sor.u32 %s138, %s139
      %p141 = scmp.eq.s32.totalorder %s140, 0
      %s143 = sadd.s32 %s142, 1
      %s144 = scalar_select %p141, %s142, %s143
      %p147 = pneg %p141
      %p148 = scmp.eq.s32.totalorder %s17, 1
      %p149 = por %p147, %p148
      %p150 = scmp.ne.s32.totalorder %s142, %s145
      %p151 = scmp.eq.s32.totalorder %s17, 0
      %p152 = por %p150, %p151
      %p153 = scmp.ne.s32.totalorder %s142, %s145
      %p154 = scmp.eq.s32.totalorder %s22, 1
      %p155 = por %p153, %p154
      %p156 = scmp.ne.s32.totalorder %s145, %s146
      %p157 = scmp.eq.s32.totalorder %s22, 0
      %p158 = por %p156, %p157
      %p159 = scmp.ne.s32.totalorder %s145, %s146
      %p160 = scmp.eq.s32.totalorder %s23, 1
      %p161 = por %p159, %p160
      %p163 = scmp.ne.s32.totalorder %s146, %s162
      %p164 = scmp.eq.s32.totalorder %s23, 0
      %p165 = por %p163, %p164
      %p166 = scmp.le.s32.totalorder 1, %s17
      %p167 = scmp.lt.s32.totalorder %s17, 3
      %p168 = pnand %p166, %p167
      %p169 = pneg %p168
      // Predicated region
      $region9: #{drnseg_forward.3} parent=5 // pred_check
        _
      $region10: #{drnseg_forward.3} parent=5 // pred_check_branch
        %171 = sbr.rel (%p168) target = $region12
      $region11: #{drnseg_forward.3} parent=5 // pred_region
        %s172 = ssub.s32 %s17, 1
        // Predicated region
        $region13: #{drnseg_forward.3} parent=11 // pred_check
          %p173 = pneg %p81
        $region14: #{drnseg_forward.3} parent=11 // pred_check_branch
          %175 = sbr.rel (%p173) target = $region16
        $region15: #{drnseg_forward.3} parent=11 // pred_region
          %s176 = smul.u32 4, %s27
          %p177 = scmp.lt.s32.totalorder %s176, 3
          %s178 = scalar_select %p177, %s176, 3
          %s179 = smul.addr %s178, 8
          %s180 = scalar_lea.vmem %s1, %s179
          %s181 = smul.u32 4, %s27
        $region16: #{drnseg_forward.3} parent=11 // pred_fallthru
          _
        // Predicated region
        $region17: #{drnseg_forward.3} parent=11 // pred_check
          %p182 = pneg %p102
        $region18: #{drnseg_forward.3} parent=11 // pred_check_branch
          %184 = sbr.rel (%p182) target = $region20
        $region19: #{drnseg_forward.3} parent=11 // pred_region
          _
        $region20: #{drnseg_forward.3} parent=11 // pred_fallthru
          _
      $region12: #{drnseg_forward.3} parent=5 // pred_fallthru
        _
      %p185 = scmp.lt.s32.totalorder %s17, 2
      // Predicated region
      $region21: #{drnseg_forward.3} parent=5 // pred_check
        %p186 = pneg %p185
      $region22: #{drnseg_forward.3} parent=5 // pred_check_branch
        %188 = sbr.rel (%p186) target = $region24
      $region23: #{drnseg_forward.3} parent=5 // pred_region
        // Predicated region
        $region25: #{drnseg_forward.3} parent=23 // pred_check
          %p189 = pneg %p49
        $region26: #{drnseg_forward.3} parent=23 // pred_check_branch
          %191 = sbr.rel (%p189) target = $region28
        $region27: #{drnseg_forward.3} parent=23 // pred_region
          %p192 = scmp.lt.s32.totalorder %s24, 1
          %s193 = scalar_select %p192, %s24, 1
          %s194 = smul.addr %s193, 2
          %s195 = smul.addr %s194, 8
          %s196 = scalar_lea.vmem %s0, %s195
        $region28: #{drnseg_forward.3} parent=23 // pred_fallthru
          _
      $region24: #{drnseg_forward.3} parent=5 // pred_fallthru
        _
      %p197 = scmp.le.s32.totalorder 1, %s17
      %p198 = scmp.lt.s32.totalorder %s17, 3
      %p199 = pnand %p197, %p198
      %p200 = pneg %p199
      // Predicated region
      $region29: #{drnseg_forward.3} parent=5 // pred_check
        _
      $region30: #{drnseg_forward.3} parent=5 // pred_check_branch
        %202 = sbr.rel (%p199) target = $region32
      $region31: #{drnseg_forward.3} parent=5 // pred_region
        %s203 = ssub.s32 %s17, 1
        %p204 = scmp.lt.s32.totalorder %s26, 1
        %s205 = scalar_select %p204, %s26, 1
        %s206 = smul.addr %s205, 2
        %s207 = smul.addr %s206, 8
        %s208 = scalar_lea.vmem %s0, %s207
        %p209 = pneg %p55
        %p210 = pneg %p52
        %s211 = smul.u32 4, %s27
        %p212 = scmp.lt.s32.totalorder %s211, 3
        %s213 = scalar_select %p212, %s211, 3
        %s214 = smul.addr %s213, 8
        %s215 = scalar_lea.vmem %s1, %s214
        %p216 = pneg %p81
        %p217 = pneg %p78
        %p218 = pneg %p102
        %p219 = pneg %p99
        %p220 = pneg %p130
        %p221 = pneg %p127
        %s222 = sand.u32 %s117, 1
        %s223 = scalar_lea.sflag [#allocation4], %s222
        %s224 = sand.u32 %s117, 1
        %s225 = smul.addr %s224, 128
        %s226 = scalar_lea.vmem [#allocation3], %s225
        %p227 = pneg %p158
        %p228 = pneg %p155
        %s229 = sand.u32 %s145, 1
        %s230 = scalar_lea.sflag [#allocation6], %s229
        %s231 = sand.u32 %s145, 1
        %s232 = smul.addr %s231, 128
        %s233 = scalar_lea.vmem [#allocation5], %s232
        %p234 = scmp.lt.s32.totalorder %s26, 1
        %s235 = scalar_select %p234, %s26, 1
        %s236 = smul.addr %s235, 2
        %s237 = smul.addr %s236, 8
        %s238 = scalar_lea.vmem %s0, %s237
        %s239 = smul.u32 4, %s27
        %p240 = scmp.lt.s32.totalorder %s239, 3
        %s241 = scalar_select %p240, %s239, 3
        %s242 = smul.addr %s241, 8
        %s243 = scalar_lea.vmem %s1, %s242
        %s244 = smul.u32 4, %s27
        %s245 = smul.u32 4, %s27
        %s246 = smul.u32 4, %s27
        %p247 = scmp.eq.s32.totalorder %s27, 0
        // Predicated region
        $region33: #{drnseg_forward.3} parent=31 // pred_check
          %p248 = pneg %p247
        $region34: #{drnseg_forward.3} parent=31 // pred_check_branch
          %250 = sbr.rel (%p248) target = $region36
        $region35: #{drnseg_forward.3} parent=31 // pred_region
          %v251 = vld [vmem:[%s238] sm:$0xff]
          %v252 = vld [vmem:[%s238 + $0x8] sm:$0xff]
          %v253 = vld [vmem:[%s2] sm:$0xf]
          %vm254 = vcmask 31744
          %v256 = vsel %vm254, %v251, 0
          %v259 = vsel %vm254, %v252, 0
          %vm261 = vcmask 1043456
          %v263 = vsel %vm261, %v253, 0
          %265 = vmatprep.subr.mxu0 0.0
          %266 = vmatpush1.msra.mxu0 %v263
          %267 = vmatprep.subr.mxu0 0.0
          %268 = vmatpush1.msra.mxu0 0.0
          %269 = vmatprep.subr.mxu0 0.0
          %270 = vmatpush1.msra.mxu0 0.0
          %271 = vmatprep.subr.mxu0 0.0
          %272 = vmatpush1.msra.mxu0 0.0
          %273 = vmatprep.subr.mxu0 0.0
          %274 = vmatpush1.msra.mxu0 0.0
          %275 = vmatprep.subr.mxu0 0.0
          %276 = vmatpush1.msra.mxu0 0.0
          %277 = vmatprep.subr.mxu0 0.0
          %278 = vmatpush1.msra.mxu0 0.0
          %279 = vmatprep.subr.mxu0 0.0
          %280 = vmatpush1.msra.mxu0 0.0
          %281 = vmatprep.subr.mxu0 0.0
          %282 = vmatpush1.msra.mxu0 0.0
          %283 = vmatprep.subr.mxu0 0.0
          %284 = vmatpush1.msra.mxu0 0.0
          %285 = vmatprep.subr.mxu0 0.0
          %286 = vmatpush1.msra.mxu0 0.0
          %287 = vmatprep.subr.mxu0 0.0
          %288 = vmatpush1.msra.mxu0 0.0
          %289 = vmatprep.subr.mxu0 0.0
          %290 = vmatpush1.msra.mxu0 0.0
          %291 = vmatprep.subr.mxu0 0.0
          %292 = vmatpush1.msra.mxu0 0.0
          %293 = vmatprep.subr.mxu0 0.0
          %294 = vmatpush1.msra.mxu0 0.0
          %295 = vmatprep.subr.mxu0 0.0
          %296 = vmatpush1.msra.mxu0 0.0
          %297 = vmatprep.subr.mxu0 0.0
          %298 = vmatpush1.msra.mxu0 0.0
          %299 = vmatprep.subr.mxu0 0.0
          %300 = vmatpush1.msra.mxu0 0.0
          %301 = vmatprep.subr.mxu0 0.0
          %302 = vmatpush1.msra.mxu0 0.0
          %303 = vmatprep.subr.mxu0 0.0
          %304 = vmatpush1.msra.mxu0 0.0
          %305 = vmatprep.subr.mxu0 0.0
          %306 = vmatpush1.msra.mxu0 0.0
          %307 = vmatprep.subr.mxu0 0.0
          %308 = vmatpush1.msra.mxu0 0.0
          %309 = vmatprep.subr.mxu0 0.0
          %310 = vmatpush1.msra.mxu0 0.0
          %311 = vmatprep.subr.mxu0 0.0
          %312 = vmatpush1.msra.mxu0 0.0
          %313 = vmatprep.subr.mxu0 0.0
          %314 = vmatpush1.msra.mxu0 0.0
          %315 = vmatprep.subr.mxu0 0.0
          %316 = vmatpush1.msra.mxu0 0.0
          %317 = vmatprep.subr.mxu0 0.0
          %318 = vmatpush1.msra.mxu0 0.0
          %319 = vmatprep.subr.mxu0 0.0
          %320 = vmatpush1.msra.mxu0 0.0
          %321 = vmatprep.subr.mxu0 0.0
          %322 = vmatpush1.msra.mxu0 0.0
          %323 = vmatprep.subr.mxu0 0.0
          %324 = vmatpush1.msra.mxu0 0.0
          %325 = vmatprep.subr.mxu0 0.0
          %326 = vmatpush1.msra.mxu0 0.0
          %327 = vmatprep.subr.mxu0 0.0
          %328 = vmatpush1.msra.mxu0 0.0
          %329 = vmatprep.mubr.f32.mxu0 0.0
          %330 = vmatmul.mubr.f32.gmra.mrb[0].mxu0 %v256
          %v331 = vpop.f32.mrb[0].mxu0
          %v332 = vadd.f32 0.0, %v331
          %v333 = vpop.f32.mrb[0].mxu0
          %334 = vmatprep.mubr.f32.mxu0 0.0
          %335 = vmatmul.mubr.f32.gmra.mrb[0].mxu0 %v259
          %v336 = vpop.f32.mrb[0].mxu0
          %v337 = vadd.f32 0.0, %v336
          %v338 = vpop.f32.mrb[0].mxu0
          %339 = vdwg.mxu0
          %vm340 = vcmask 261120
          %341 = vst.msk [vmem:[#allocation2] sm:$0xff] %vm340, %v332
          %342 = vst.msk [vmem:[#allocation2 + $0x8] sm:$0xff] %vm340, %v337
        $region36: #{drnseg_forward.3} parent=31 // pred_fallthru
          _
        %v343 = vld [vmem:[%s243] sm:$0xff]
        %v344 = vld [vmem:[%s243 + $0x8] sm:$0xff]
        %v345 = vld [vmem:[%s243 + $0x10] sm:$0xff]
        %v346 = vld [vmem:[%s243 + $0x18] sm:$0xff]
        %v347 = vld [vmem:[#allocation2] sm:$0xf]
        %vm348 = vcmask 31744
        %v350 = vsel %vm348, %v343, 0
        %v353 = vsel %vm348, %v344, 0
        %v356 = vsel %vm348, %v345, 0
        %v359 = vsel %vm348, %v346, 0
        %vm361 = vcmask 1043456
        %v363 = vsel %vm361, %v347, 0
        %365 = vmatprep.subr.mxu0 0.0
        %366 = vmatpush1.msra.mxu0 %v363
        %367 = vmatprep.subr.mxu0 0.0
        %368 = vmatpush1.msra.mxu0 0.0
        %369 = vmatprep.subr.mxu0 0.0
        %370 = vmatpush1.msra.mxu0 0.0
        %371 = vmatprep.subr.mxu0 0.0
        %372 = vmatpush1.msra.mxu0 0.0
        %373 = vmatprep.subr.mxu0 0.0
        %374 = vmatpush1.msra.mxu0 0.0
        %375 = vmatprep.subr.mxu0 0.0
        %376 = vmatpush1.msra.mxu0 0.0
        %377 = vmatprep.subr.mxu0 0.0
        %378 = vmatpush1.msra.mxu0 0.0
        %379 = vmatprep.subr.mxu0 0.0
        %380 = vmatpush1.msra.mxu0 0.0
        %381 = vmatprep.subr.mxu0 0.0
        %382 = vmatpush1.msra.mxu0 0.0
        %383 = vmatprep.subr.mxu0 0.0
        %384 = vmatpush1.msra.mxu0 0.0
        %385 = vmatprep.subr.mxu0 0.0
        %386 = vmatpush1.msra.mxu0 0.0
        %387 = vmatprep.subr.mxu0 0.0
        %388 = vmatpush1.msra.mxu0 0.0
        %389 = vmatprep.subr.mxu0 0.0
        %390 = vmatpush1.msra.mxu0 0.0
        %391 = vmatprep.subr.mxu0 0.0
        %392 = vmatpush1.msra.mxu0 0.0
        %393 = vmatprep.subr.mxu0 0.0
        %394 = vmatpush1.msra.mxu0 0.0
        %395 = vmatprep.subr.mxu0 0.0
        %396 = vmatpush1.msra.mxu0 0.0
        %397 = vmatprep.subr.mxu0 0.0
        %398 = vmatpush1.msra.mxu0 0.0
        %399 = vmatprep.subr.mxu0 0.0
        %400 = vmatpush1.msra.mxu0 0.0
        %401 = vmatprep.subr.mxu0 0.0
        %402 = vmatpush1.msra.mxu0 0.0
        %403 = vmatprep.subr.mxu0 0.0
        %404 = vmatpush1.msra.mxu0 0.0
        %405 = vmatprep.subr.mxu0 0.0
        %406 = vmatpush1.msra.mxu0 0.0
        %407 = vmatprep.subr.mxu0 0.0
        %408 = vmatpush1.msra.mxu0 0.0
        %409 = vmatprep.subr.mxu0 0.0
        %410 = vmatpush1.msra.mxu0 0.0
        %411 = vmatprep.subr.mxu0 0.0
        %412 = vmatpush1.msra.mxu0 0.0
        %413 = vmatprep.subr.mxu0 0.0
        %414 = vmatpush1.msra.mxu0 0.0
        %415 = vmatprep.subr.mxu0 0.0
        %416 = vmatpush1.msra.mxu0 0.0
        %417 = vmatprep.subr.mxu0 0.0
        %418 = vmatpush1.msra.mxu0 0.0
        %419 = vmatprep.subr.mxu0 0.0
        %420 = vmatpush1.msra.mxu0 0.0
        %421 = vmatprep.subr.mxu0 0.0
        %422 = vmatpush1.msra.mxu0 0.0
        %423 = vmatprep.subr.mxu0 0.0
        %424 = vmatpush1.msra.mxu0 0.0
        %425 = vmatprep.subr.mxu0 0.0
        %426 = vmatpush1.msra.mxu0 0.0
        %427 = vmatprep.subr.mxu0 0.0
        %428 = vmatpush1.msra.mxu0 0.0
        %429 = vmatprep.mubr.f32.mxu0 0.0
        %430 = vmatmul.mubr.f32.gmra.mrb[0].mxu0 %v350
        %v431 = vpop.f32.mrb[0].mxu0
        %v432 = vadd.f32 0.0, %v431
        %v433 = vpop.f32.mrb[0].mxu0
        %434 = vmatprep.mubr.f32.mxu0 0.0
        %435 = vmatmul.mubr.f32.gmra.mrb[0].mxu0 %v353
        %v436 = vpop.f32.mrb[0].mxu0
        %v437 = vadd.f32 0.0, %v436
        %v438 = vpop.f32.mrb[0].mxu0
        %439 = vmatprep.mubr.f32.mxu0 0.0
        %440 = vmatmul.mubr.f32.gmra.mrb[0].mxu0 %v356
        %v441 = vpop.f32.mrb[0].mxu0
        %v442 = vadd.f32 0.0, %v441
        %v443 = vpop.f32.mrb[0].mxu0
        %444 = vmatprep.mubr.f32.mxu0 0.0
        %445 = vmatmul.mubr.f32.gmra.mrb[0].mxu0 %v359
        %v446 = vpop.f32.mrb[0].mxu0
        %v447 = vadd.f32 0.0, %v446
        %v448 = vpop.f32.mrb[0].mxu0
        %449 = vdwg.mxu0
        %vm450 = vcmask 261120
        %451 = vst.msk [vmem:[%s226] sm:$0xff] %vm450, %v432
        %452 = vst.msk [vmem:[%s226 + $0x8] sm:$0xff] %vm450, %v437
        %453 = vst.msk [vmem:[%s226 + $0x10] sm:$0xff] %vm450, %v442
        %454 = vst.msk [vmem:[%s226 + $0x18] sm:$0xff] %vm450, %v447
        %v455 = vld [vmem:[#allocation2 + $0x4] sm:$0xf]
        %v457 = vsel %vm361, %v455, 0
        %459 = vmatprep.subr.mxu0 0.0
        %460 = vmatpush1.msra.mxu0 %v457
        %461 = vmatprep.subr.mxu0 0.0
        %462 = vmatpush1.msra.mxu0 0.0
        %463 = vmatprep.subr.mxu0 0.0
        %464 = vmatpush1.msra.mxu0 0.0
        %465 = vmatprep.subr.mxu0 0.0
        %466 = vmatpush1.msra.mxu0 0.0
        %467 = vmatprep.subr.mxu0 0.0
        %468 = vmatpush1.msra.mxu0 0.0
        %469 = vmatprep.subr.mxu0 0.0
        %470 = vmatpush1.msra.mxu0 0.0
        %471 = vmatprep.subr.mxu0 0.0
        %472 = vmatpush1.msra.mxu0 0.0
        %473 = vmatprep.subr.mxu0 0.0
        %474 = vmatpush1.msra.mxu0 0.0
        %475 = vmatprep.subr.mxu0 0.0
        %476 = vmatpush1.msra.mxu0 0.0
        %477 = vmatprep.subr.mxu0 0.0
        %478 = vmatpush1.msra.mxu0 0.0
        %479 = vmatprep.subr.mxu0 0.0
        %480 = vmatpush1.msra.mxu0 0.0
        %481 = vmatprep.subr.mxu0 0.0
        %482 = vmatpush1.msra.mxu0 0.0
        %483 = vmatprep.subr.mxu0 0.0
        %484 = vmatpush1.msra.mxu0 0.0
        %485 = vmatprep.subr.mxu0 0.0
        %486 = vmatpush1.msra.mxu0 0.0
        %487 = vmatprep.subr.mxu0 0.0
        %488 = vmatpush1.msra.mxu0 0.0
        %489 = vmatprep.subr.mxu0 0.0
        %490 = vmatpush1.msra.mxu0 0.0
        %491 = vmatprep.subr.mxu0 0.0
        %492 = vmatpush1.msra.mxu0 0.0
        %493 = vmatprep.subr.mxu0 0.0
        %494 = vmatpush1.msra.mxu0 0.0
        %495 = vmatprep.subr.mxu0 0.0
        %496 = vmatpush1.msra.mxu0 0.0
        %497 = vmatprep.subr.mxu0 0.0
        %498 = vmatpush1.msra.mxu0 0.0
        %499 = vmatprep.subr.mxu0 0.0
        %500 = vmatpush1.msra.mxu0 0.0
        %501 = vmatprep.subr.mxu0 0.0
        %502 = vmatpush1.msra.mxu0 0.0
        %503 = vmatprep.subr.mxu0 0.0
        %504 = vmatpush1.msra.mxu0 0.0
        %505 = vmatprep.subr.mxu0 0.0
        %506 = vmatpush1.msra.mxu0 0.0
        %507 = vmatprep.subr.mxu0 0.0
        %508 = vmatpush1.msra.mxu0 0.0
        %509 = vmatprep.subr.mxu0 0.0
        %510 = vmatpush1.msra.mxu0 0.0
        %511 = vmatprep.subr.mxu0 0.0
        %512 = vmatpush1.msra.mxu0 0.0
        %513 = vmatprep.subr.mxu0 0.0
        %514 = vmatpush1.msra.mxu0 0.0
        %515 = vmatprep.subr.mxu0 0.0
        %516 = vmatpush1.msra.mxu0 0.0
        %517 = vmatprep.subr.mxu0 0.0
        %518 = vmatpush1.msra.mxu0 0.0
        %519 = vmatprep.subr.mxu0 0.0
        %520 = vmatpush1.msra.mxu0 0.0
        %521 = vmatprep.subr.mxu0 0.0
        %522 = vmatpush1.msra.mxu0 0.0
        %523 = vmatprep.mubr.f32.mxu0 0.0
        %524 = vmatmul.mubr.f32.gmra.mrb[0].mxu0 %v350
        %v525 = vpop.f32.mrb[0].mxu0
        %v526 = vadd.f32 0.0, %v525
        %v527 = vpop.f32.mrb[0].mxu0
        %528 = vmatprep.mubr.f32.mxu0 0.0
        %529 = vmatmul.mubr.f32.gmra.mrb[0].mxu0 %v353
        %v530 = vpop.f32.mrb[0].mxu0
        %v531 = vadd.f32 0.0, %v530
        %v532 = vpop.f32.mrb[0].mxu0
        %533 = vmatprep.mubr.f32.mxu0 0.0
        %534 = vmatmul.mubr.f32.gmra.mrb[0].mxu0 %v356
        %v535 = vpop.f32.mrb[0].mxu0
        %v536 = vadd.f32 0.0, %v535
        %v537 = vpop.f32.mrb[0].mxu0
        %538 = vmatprep.mubr.f32.mxu0 0.0
        %539 = vmatmul.mubr.f32.gmra.mrb[0].mxu0 %v359
        %v540 = vpop.f32.mrb[0].mxu0
        %v541 = vadd.f32 0.0, %v540
        %v542 = vpop.f32.mrb[0].mxu0
        %543 = vdwg.mxu0
        %s544 = scalar_lea.vmem %s226, 32 [#allocation3]
        %545 = vst.msk [vmem:[%s544] sm:$0xff] %vm450, %v526
        %546 = vst.msk [vmem:[%s544 + $0x8] sm:$0xff] %vm450, %v531
        %547 = vst.msk [vmem:[%s544 + $0x10] sm:$0xff] %vm450, %v536
        %548 = vst.msk [vmem:[%s544 + $0x18] sm:$0xff] %vm450, %v541
        %v549 = vmax.f32 %v432, %v526
        %v550 = vmax.f32 %v437, %v531
        %v551 = vmax.f32 %v442, %v536
        %v552 = vmax.f32 %v447, %v541
        %v553 = vld [vmem:[#allocation2 + $0x8] sm:$0xf]
        %v555 = vsel %vm361, %v553, 0
        %557 = vmatprep.subr.mxu0 0.0
        %558 = vmatpush1.msra.mxu0 %v555
        %559 = vmatprep.subr.mxu0 0.0
        %560 = vmatpush1.msra.mxu0 0.0
        %561 = vmatprep.subr.mxu0 0.0
        %562 = vmatpush1.msra.mxu0 0.0
        %563 = vmatprep.subr.mxu0 0.0
        %564 = vmatpush1.msra.mxu0 0.0
        %565 = vmatprep.subr.mxu0 0.0
        %566 = vmatpush1.msra.mxu0 0.0
        %567 = vmatprep.subr.mxu0 0.0
        %568 = vmatpush1.msra.mxu0 0.0
        %569 = vmatprep.subr.mxu0 0.0
        %570 = vmatpush1.msra.mxu0 0.0
        %571 = vmatprep.subr.mxu0 0.0
        %572 = vmatpush1.msra.mxu0 0.0
        %573 = vmatprep.subr.mxu0 0.0
        %574 = vmatpush1.msra.mxu0 0.0
        %575 = vmatprep.subr.mxu0 0.0
        %576 = vmatpush1.msra.mxu0 0.0
        %577 = vmatprep.subr.mxu0 0.0
        %578 = vmatpush1.msra.mxu0 0.0
        %579 = vmatprep.subr.mxu0 0.0
        %580 = vmatpush1.msra.mxu0 0.0
        %581 = vmatprep.subr.mxu0 0.0
        %582 = vmatpush1.msra.mxu0 0.0
        %583 = vmatprep.subr.mxu0 0.0
        %584 = vmatpush1.msra.mxu0 0.0
        %585 = vmatprep.subr.mxu0 0.0
        %586 = vmatpush1.msra.mxu0 0.0
        %587 = vmatprep.subr.mxu0 0.0
        %588 = vmatpush1.msra.mxu0 0.0
        %589 = vmatprep.subr.mxu0 0.0
        %590 = vmatpush1.msra.mxu0 0.0
        %591 = vmatprep.subr.mxu0 0.0
        %592 = vmatpush1.msra.mxu0 0.0
        %593 = vmatprep.subr.mxu0 0.0
        %594 = vmatpush1.msra.mxu0 0.0
        %595 = vmatprep.subr.mxu0 0.0
        %596 = vmatpush1.msra.mxu0 0.0
        %597 = vmatprep.subr.mxu0 0.0
        %598 = vmatpush1.msra.mxu0 0.0
        %599 = vmatprep.subr.mxu0 0.0
        %600 = vmatpush1.msra.mxu0 0.0
        %601 = vmatprep.subr.mxu0 0.0
        %602 = vmatpush1.msra.mxu0 0.0
        %603 = vmatprep.subr.mxu0 0.0
        %604 = vmatpush1.msra.mxu0 0.0
        %605 = vmatprep.subr.mxu0 0.0
        %606 = vmatpush1.msra.mxu0 0.0
        %607 = vmatprep.subr.mxu0 0.0
        %608 = vmatpush1.msra.mxu0 0.0
        %609 = vmatprep.subr.mxu0 0.0
        %610 = vmatpush1.msra.mxu0 0.0
        %611 = vmatprep.subr.mxu0 0.0
        %612 = vmatpush1.msra.mxu0 0.0
        %613 = vmatprep.subr.mxu0 0.0
        %614 = vmatpush1.msra.mxu0 0.0
        %615 = vmatprep.subr.mxu0 0.0
        %616 = vmatpush1.msra.mxu0 0.0
        %617 = vmatprep.subr.mxu0 0.0
        %618 = vmatpush1.msra.mxu0 0.0
        %619 = vmatprep.subr.mxu0 0.0
        %620 = vmatpush1.msra.mxu0 0.0
        %621 = vmatprep.mubr.f32.mxu0 0.0
        %622 = vmatmul.mubr.f32.gmra.mrb[0].mxu0 %v350
        %v623 = vpop.f32.mrb[0].mxu0
        %v624 = vadd.f32 0.0, %v623
        %v625 = vpop.f32.mrb[0].mxu0
        %626 = vmatprep.mubr.f32.mxu0 0.0
        %627 = vmatmul.mubr.f32.gmra.mrb[0].mxu0 %v353
        %v628 = vpop.f32.mrb[0].mxu0
        %v629 = vadd.f32 0.0, %v628
        %v630 = vpop.f32.mrb[0].mxu0
        %631 = vmatprep.mubr.f32.mxu0 0.0
        %632 = vmatmul.mubr.f32.gmra.mrb[0].mxu0 %v356
        %v633 = vpop.f32.mrb[0].mxu0
        %v634 = vadd.f32 0.0, %v633
        %v635 = vpop.f32.mrb[0].mxu0
        %636 = vmatprep.mubr.f32.mxu0 0.0
        %637 = vmatmul.mubr.f32.gmra.mrb[0].mxu0 %v359
        %v638 = vpop.f32.mrb[0].mxu0
        %v639 = vadd.f32 0.0, %v638
        %v640 = vpop.f32.mrb[0].mxu0
        %641 = vdwg.mxu0
        %s642 = scalar_lea.vmem %s226, 64 [#allocation3]
        %643 = vst.msk [vmem:[%s642] sm:$0xff] %vm450, %v624
        %644 = vst.msk [vmem:[%s642 + $0x8] sm:$0xff] %vm450, %v629
        %645 = vst.msk [vmem:[%s642 + $0x10] sm:$0xff] %vm450, %v634
        %646 = vst.msk [vmem:[%s642 + $0x18] sm:$0xff] %vm450, %v639
        %v647 = vmax.f32 %v549, %v624
        %v648 = vmax.f32 %v550, %v629
        %v649 = vmax.f32 %v551, %v634
        %v650 = vmax.f32 %v552, %v639
        %v651 = vld [vmem:[#allocation2 + $0xc] sm:$0xf]
        %v653 = vsel %vm361, %v651, 0
        %655 = vmatprep.subr.mxu0 0.0
        %656 = vmatpush1.msra.mxu0 %v653
        %657 = vmatprep.subr.mxu0 0.0
        %658 = vmatpush1.msra.mxu0 0.0
        %659 = vmatprep.subr.mxu0 0.0
        %660 = vmatpush1.msra.mxu0 0.0
        %661 = vmatprep.subr.mxu0 0.0
        %662 = vmatpush1.msra.mxu0 0.0
        %663 = vmatprep.subr.mxu0 0.0
        %664 = vmatpush1.msra.mxu0 0.0
        %665 = vmatprep.subr.mxu0 0.0
        %666 = vmatpush1.msra.mxu0 0.0
        %667 = vmatprep.subr.mxu0 0.0
        %668 = vmatpush1.msra.mxu0 0.0
        %669 = vmatprep.subr.mxu0 0.0
        %670 = vmatpush1.msra.mxu0 0.0
        %671 = vmatprep.subr.mxu0 0.0
        %672 = vmatpush1.msra.mxu0 0.0
        %673 = vmatprep.subr.mxu0 0.0
        %674 = vmatpush1.msra.mxu0 0.0
        %675 = vmatprep.subr.mxu0 0.0
        %676 = vmatpush1.msra.mxu0 0.0
        %677 = vmatprep.subr.mxu0 0.0
        %678 = vmatpush1.msra.mxu0 0.0
        %679 = vmatprep.subr.mxu0 0.0
        %680 = vmatpush1.msra.mxu0 0.0
        %681 = vmatprep.subr.mxu0 0.0
        %682 = vmatpush1.msra.mxu0 0.0
        %683 = vmatprep.subr.mxu0 0.0
        %684 = vmatpush1.msra.mxu0 0.0
        %685 = vmatprep.subr.mxu0 0.0
        %686 = vmatpush1.msra.mxu0 0.0
        %687 = vmatprep.subr.mxu0 0.0
        %688 = vmatpush1.msra.mxu0 0.0
        %689 = vmatprep.subr.mxu0 0.0
        %690 = vmatpush1.msra.mxu0 0.0
        %691 = vmatprep.subr.mxu0 0.0
        %692 = vmatpush1.msra.mxu0 0.0
        %693 = vmatprep.subr.mxu0 0.0
        %694 = vmatpush1.msra.mxu0 0.0
        %695 = vmatprep.subr.mxu0 0.0
        %696 = vmatpush1.msra.mxu0 0.0
        %697 = vmatprep.subr.mxu0 0.0
        %698 = vmatpush1.msra.mxu0 0.0
        %699 = vmatprep.subr.mxu0 0.0
        %700 = vmatpush1.msra.mxu0 0.0
        %701 = vmatprep.subr.mxu0 0.0
        %702 = vmatpush1.msra.mxu0 0.0
        %703 = vmatprep.subr.mxu0 0.0
        %704 = vmatpush1.msra.mxu0 0.0
        %705 = vmatprep.subr.mxu0 0.0
        %706 = vmatpush1.msra.mxu0 0.0
        %707 = vmatprep.subr.mxu0 0.0
        %708 = vmatpush1.msra.mxu0 0.0
        %709 = vmatprep.subr.mxu0 0.0
        %710 = vmatpush1.msra.mxu0 0.0
        %711 = vmatprep.subr.mxu0 0.0
        %712 = vmatpush1.msra.mxu0 0.0
        %713 = vmatprep.subr.mxu0 0.0
        %714 = vmatpush1.msra.mxu0 0.0
        %715 = vmatprep.subr.mxu0 0.0
        %716 = vmatpush1.msra.mxu0 0.0
        %717 = vmatprep.subr.mxu0 0.0
        %718 = vmatpush1.msra.mxu0 0.0
        %719 = vmatprep.mubr.f32.mxu0 0.0
        %720 = vmatmul.mubr.f32.gmra.mrb[0].mxu0 %v350
        %v721 = vpop.f32.mrb[0].mxu0
        %v722 = vadd.f32 0.0, %v721
        %v723 = vpop.f32.mrb[0].mxu0
        %724 = vmatprep.mubr.f32.mxu0 0.0
        %725 = vmatmul.mubr.f32.gmra.mrb[0].mxu0 %v353
        %v726 = vpop.f32.mrb[0].mxu0
        %v727 = vadd.f32 0.0, %v726
        %v728 = vpop.f32.mrb[0].mxu0
        %729 = vmatprep.mubr.f32.mxu0 0.0
        %730 = vmatmul.mubr.f32.gmra.mrb[0].mxu0 %v356
        %v731 = vpop.f32.mrb[0].mxu0
        %v732 = vadd.f32 0.0, %v731
        %v733 = vpop.f32.mrb[0].mxu0
        %734 = vmatprep.mubr.f32.mxu0 0.0
        %735 = vmatmul.mubr.f32.gmra.mrb[0].mxu0 %v359
        %v736 = vpop.f32.mrb[0].mxu0
        %v737 = vadd.f32 0.0, %v736
        %v738 = vpop.f32.mrb[0].mxu0
        %739 = vdwg.mxu0
        %s740 = scalar_lea.vmem %s226, 96 [#allocation3]
        %741 = vst.msk [vmem:[%s740] sm:$0xff] %vm450, %v722
        %742 = vst.msk [vmem:[%s740 + $0x8] sm:$0xff] %vm450, %v727
        %743 = vst.msk [vmem:[%s740 + $0x10] sm:$0xff] %vm450, %v732
        %744 = vst.msk [vmem:[%s740 + $0x18] sm:$0xff] %vm450, %v737
        %v745 = vmax.f32 %v647, %v722
        %v746 = vmax.f32 %v648, %v727
        %v747 = vmax.f32 %v649, %v732
        %v748 = vmax.f32 %v650, %v737
        %v749 = vld [vmem:[%s226] sm:$0xff]
        %v750 = vld [vmem:[%s226 + $0x8] sm:$0xff]
        %v751 = vld [vmem:[%s226 + $0x10] sm:$0xff]
        %v752 = vld [vmem:[%s226 + $0x18] sm:$0xff]
        %v753 = vsub.f32 %v749, %v745
        %v754 = vsub.f32 %v750, %v746
        %v755 = vsub.f32 %v751, %v747
        %v756 = vsub.f32 %v752, %v748
        %v757 = vmul.f32 %v753, 1.442695
        %v758 = vpow.pop %v757
        %v759 = vmul.f32 %v754, 1.442695
        %v760 = vpow.pop %v759
        %v761 = vmul.f32 %v755, 1.442695
        %v762 = vpow.pop %v761
        %v763 = vmul.f32 %v756, 1.442695
        %v764 = vpow.pop %v763
        %765 = vst.msk [vmem:[%s233] sm:$0xff] %vm450, %v758
        %766 = vst.msk [vmem:[%s233 + $0x8] sm:$0xff] %vm450, %v760
        %767 = vst.msk [vmem:[%s233 + $0x10] sm:$0xff] %vm450, %v762
        %768 = vst.msk [vmem:[%s233 + $0x18] sm:$0xff] %vm450, %v764
        %v769 = vld [vmem:[%s544] sm:$0xff]
        %v770 = vld [vmem:[%s544 + $0x8] sm:$0xff]
        %v771 = vld [vmem:[%s544 + $0x10] sm:$0xff]
        %v772 = vld [vmem:[%s544 + $0x18] sm:$0xff]
        %v773 = vsub.f32 %v769, %v745
        %v774 = vsub.f32 %v770, %v746
        %v775 = vsub.f32 %v771, %v747
        %v776 = vsub.f32 %v772, %v748
        %v777 = vmul.f32 %v773, 1.442695
        %v778 = vpow.pop %v777
        %v779 = vmul.f32 %v774, 1.442695
        %v780 = vpow.pop %v779
        %v781 = vmul.f32 %v775, 1.442695
        %v782 = vpow.pop %v781
        %v783 = vmul.f32 %v776, 1.442695
        %v784 = vpow.pop %v783
        %s785 = scalar_lea.vmem %s233, 32 [#allocation5]
        %786 = vst.msk [vmem:[%s785] sm:$0xff] %vm450, %v778
        %787 = vst.msk [vmem:[%s785 + $0x8] sm:$0xff] %vm450, %v780
        %788 = vst.msk [vmem:[%s785 + $0x10] sm:$0xff] %vm450, %v782
        %789 = vst.msk [vmem:[%s785 + $0x18] sm:$0xff] %vm450, %v784
        %v790 = vadd.f32 %v758, %v778
        %v791 = vadd.f32 %v760, %v780
        %v792 = vadd.f32 %v762, %v782
        %v793 = vadd.f32 %v764, %v784
        %v794 = vld [vmem:[%s642] sm:$0xff]
        %v795 = vld [vmem:[%s642 + $0x8] sm:$0xff]
        %v796 = vld [vmem:[%s642 + $0x10] sm:$0xff]
        %v797 = vld [vmem:[%s642 + $0x18] sm:$0xff]
        %v798 = vsub.f32 %v794, %v745
        %v799 = vsub.f32 %v795, %v746
        %v800 = vsub.f32 %v796, %v747
        %v801 = vsub.f32 %v797, %v748
        %v802 = vmul.f32 %v798, 1.442695
        %v803 = vpow.pop %v802
        %v804 = vmul.f32 %v799, 1.442695
        %v805 = vpow.pop %v804
        %v806 = vmul.f32 %v800, 1.442695
        %v807 = vpow.pop %v806
        %v808 = vmul.f32 %v801, 1.442695
        %v809 = vpow.pop %v808
        %s810 = scalar_lea.vmem %s233, 64 [#allocation5]
        %811 = vst.msk [vmem:[%s810] sm:$0xff] %vm450, %v803
        %812 = vst.msk [vmem:[%s810 + $0x8] sm:$0xff] %vm450, %v805
        %813 = vst.msk [vmem:[%s810 + $0x10] sm:$0xff] %vm450, %v807
        %814 = vst.msk [vmem:[%s810 + $0x18] sm:$0xff] %vm450, %v809
        %v815 = vadd.f32 %v790, %v803
        %v816 = vadd.f32 %v791, %v805
        %v817 = vadd.f32 %v792, %v807
        %v818 = vadd.f32 %v793, %v809
        %v819 = vld [vmem:[%s740] sm:$0xff]
        %v820 = vld [vmem:[%s740 + $0x8] sm:$0xff]
        %v821 = vld [vmem:[%s740 + $0x10] sm:$0xff]
        %v822 = vld [vmem:[%s740 + $0x18] sm:$0xff]
        %v823 = vsub.f32 %v819, %v745
        %v824 = vsub.f32 %v820, %v746
        %v825 = vsub.f32 %v821, %v747
        %v826 = vsub.f32 %v822, %v748
        %v827 = vmul.f32 %v823, 1.442695
        %v828 = vpow.pop %v827
        %v829 = vmul.f32 %v824, 1.442695
        %v830 = vpow.pop %v829
        %v831 = vmul.f32 %v825, 1.442695
        %v832 = vpow.pop %v831
        %v833 = vmul.f32 %v826, 1.442695
        %v834 = vpow.pop %v833
        %s835 = scalar_lea.vmem %s233, 96 [#allocation5]
        %836 = vst.msk [vmem:[%s835] sm:$0xff] %vm450, %v828
        %837 = vst.msk [vmem:[%s835 + $0x8] sm:$0xff] %vm450, %v830
        %838 = vst.msk [vmem:[%s835 + $0x10] sm:$0xff] %vm450, %v832
        %839 = vst.msk [vmem:[%s835 + $0x18] sm:$0xff] %vm450, %v834
        %v840 = vadd.f32 %v815, %v828
        %v841 = vadd.f32 %v816, %v830
        %v842 = vadd.f32 %v817, %v832
        %v843 = vadd.f32 %v818, %v834
        %v844 = vrcp.pop %v840
        %v845 = vrcp.pop %v841
        %v846 = vrcp.pop %v842
        %v847 = vrcp.pop %v843
        %v848 = vlog2.pop %v840
        %v849 = vmul.f32 %v848, 0.6931472
        %v850 = vlog2.pop %v841
        %v851 = vmul.f32 %v850, 0.6931472
        %v852 = vlog2.pop %v842
        %v853 = vmul.f32 %v852, 0.6931472
        %v854 = vlog2.pop %v843
        %v855 = vmul.f32 %v854, 0.6931472
        %v856 = vadd.f32 %v745, %v849
        %v857 = vadd.f32 %v746, %v851
        %v858 = vadd.f32 %v747, %v853
        %v859 = vadd.f32 %v748, %v855
        %v860 = vld [vmem:[%s233] sm:$0xff]
        %v861 = vld [vmem:[%s233 + $0x8] sm:$0xff]
        %v862 = vld [vmem:[%s233 + $0x10] sm:$0xff]
        %v863 = vld [vmem:[%s233 + $0x18] sm:$0xff]
        %v864 = vmul.f32 %v860, %v844
        %v865 = vmul.f32 %v861, %v845
        %v866 = vmul.f32 %v862, %v846
        %v867 = vmul.f32 %v863, %v847
        %868 = vst.msk [vmem:[%s233] sm:$0xff] %vm450, %v864
        %869 = vst.msk [vmem:[%s233 + $0x8] sm:$0xff] %vm450, %v865
        %870 = vst.msk [vmem:[%s233 + $0x10] sm:$0xff] %vm450, %v866
        %871 = vst.msk [vmem:[%s233 + $0x18] sm:$0xff] %vm450, %v867
        %v872 = vld [vmem:[%s226] sm:$0xff]
        %v873 = vld [vmem:[%s226 + $0x8] sm:$0xff]
        %v874 = vld [vmem:[%s226 + $0x10] sm:$0xff]
        %v875 = vld [vmem:[%s226 + $0x18] sm:$0xff]
        %v876 = vsub.f32 %v872, %v856
        %v877 = vsub.f32 %v873, %v857
        %v878 = vsub.f32 %v874, %v858
        %v879 = vsub.f32 %v875, %v859
        %880 = vst.msk [vmem:[%s226] sm:$0xff] %vm450, %v876
        %881 = vst.msk [vmem:[%s226 + $0x8] sm:$0xff] %vm450, %v877
        %882 = vst.msk [vmem:[%s226 + $0x10] sm:$0xff] %vm450, %v878
        %883 = vst.msk [vmem:[%s226 + $0x18] sm:$0xff] %vm450, %v879
        %v884 = vld [vmem:[%s785] sm:$0xff]
        %v885 = vld [vmem:[%s785 + $0x8] sm:$0xff]
        %v886 = vld [vmem:[%s785 + $0x10] sm:$0xff]
        %v887 = vld [vmem:[%s785 + $0x18] sm:$0xff]
        %v888 = vmul.f32 %v884, %v844
        %v889 = vmul.f32 %v885, %v845
        %v890 = vmul.f32 %v886, %v846
        %v891 = vmul.f32 %v887, %v847
        %892 = vst.msk [vmem:[%s785] sm:$0xff] %vm450, %v888
        %893 = vst.msk [vmem:[%s785 + $0x8] sm:$0xff] %vm450, %v889
        %894 = vst.msk [vmem:[%s785 + $0x10] sm:$0xff] %vm450, %v890
        %895 = vst.msk [vmem:[%s785 + $0x18] sm:$0xff] %vm450, %v891
        %v896 = vld [vmem:[%s544] sm:$0xff]
        %v897 = vld [vmem:[%s544 + $0x8] sm:$0xff]
        %v898 = vld [vmem:[%s544 + $0x10] sm:$0xff]
        %v899 = vld [vmem:[%s544 + $0x18] sm:$0xff]
        %v900 = vsub.f32 %v896, %v856
        %v901 = vsub.f32 %v897, %v857
        %v902 = vsub.f32 %v898, %v858
        %v903 = vsub.f32 %v899, %v859
        %904 = vst.msk [vmem:[%s544] sm:$0xff] %vm450, %v900
        %905 = vst.msk [vmem:[%s544 + $0x8] sm:$0xff] %vm450, %v901
        %906 = vst.msk [vmem:[%s544 + $0x10] sm:$0xff] %vm450, %v902
        %907 = vst.msk [vmem:[%s544 + $0x18] sm:$0xff] %vm450, %v903
        %v908 = vld [vmem:[%s810] sm:$0xff]
        %v909 = vld [vmem:[%s810 + $0x8] sm:$0xff]
        %v910 = vld [vmem:[%s810 + $0x10] sm:$0xff]
        %v911 = vld [vmem:[%s810 + $0x18] sm:$0xff]
        %v912 = vmul.f32 %v908, %v844
        %v913 = vmul.f32 %v909, %v845
        %v914 = vmul.f32 %v910, %v846
        %v915 = vmul.f32 %v911, %v847
        %916 = vst.msk [vmem:[%s810] sm:$0xff] %vm450, %v912
        %917 = vst.msk [vmem:[%s810 + $0x8] sm:$0xff] %vm450, %v913
        %918 = vst.msk [vmem:[%s810 + $0x10] sm:$0xff] %vm450, %v914
        %919 = vst.msk [vmem:[%s810 + $0x18] sm:$0xff] %vm450, %v915
        %v920 = vld [vmem:[%s642] sm:$0xff]
        %v921 = vld [vmem:[%s642 + $0x8] sm:$0xff]
        %v922 = vld [vmem:[%s642 + $0x10] sm:$0xff]
        %v923 = vld [vmem:[%s642 + $0x18] sm:$0xff]
        %v924 = vsub.f32 %v920, %v856
        %v925 = vsub.f32 %v921, %v857
        %v926 = vsub.f32 %v922, %v858
        %v927 = vsub.f32 %v923, %v859
        %928 = vst.msk [vmem:[%s642] sm:$0xff] %vm450, %v924
        %929 = vst.msk [vmem:[%s642 + $0x8] sm:$0xff] %vm450, %v925
        %930 = vst.msk [vmem:[%s642 + $0x10] sm:$0xff] %vm450, %v926
        %931 = vst.msk [vmem:[%s642 + $0x18] sm:$0xff] %vm450, %v927
        %v932 = vld [vmem:[%s835] sm:$0xff]
        %v933 = vld [vmem:[%s835 + $0x8] sm:$0xff]
        %v934 = vld [vmem:[%s835 + $0x10] sm:$0xff]
        %v935 = vld [vmem:[%s835 + $0x18] sm:$0xff]
        %v936 = vmul.f32 %v932, %v844
        %v937 = vmul.f32 %v933, %v845
        %v938 = vmul.f32 %v934, %v846
        %v939 = vmul.f32 %v935, %v847
        %940 = vst.msk [vmem:[%s835] sm:$0xff] %vm450, %v936
        %941 = vst.msk [vmem:[%s835 + $0x8] sm:$0xff] %vm450, %v937
        %942 = vst.msk [vmem:[%s835 + $0x10] sm:$0xff] %vm450, %v938
        %943 = vst.msk [vmem:[%s835 + $0x18] sm:$0xff] %vm450, %v939
        %v944 = vld [vmem:[%s740] sm:$0xff]
        %v945 = vld [vmem:[%s740 + $0x8] sm:$0xff]
        %v946 = vld [vmem:[%s740 + $0x10] sm:$0xff]
        %v947 = vld [vmem:[%s740 + $0x18] sm:$0xff]
        %v948 = vsub.f32 %v944, %v856
        %v949 = vsub.f32 %v945, %v857
        %v950 = vsub.f32 %v946, %v858
        %v951 = vsub.f32 %v947, %v859
        %952 = vst.msk [vmem:[%s740] sm:$0xff] %vm450, %v948
        %953 = vst.msk [vmem:[%s740 + $0x8] sm:$0xff] %vm450, %v949
        %954 = vst.msk [vmem:[%s740 + $0x10] sm:$0xff] %vm450, %v950
        %955 = vst.msk [vmem:[%s740 + $0x18] sm:$0xff] %vm450, %v951
        %s956 = sand.u32 %s117, 1
        %s957 = scalar_lea.sflag [#allocation4], %s956
        %s958 = sand.u32 %s117, 1
        %s959 = smul.addr %s958, 128
        %s960 = scalar_lea.vmem [#allocation3], %s959
        %s961 = sand.u32 %s145, 1
        %s962 = scalar_lea.sflag [#allocation6], %s961
        %s963 = sand.u32 %s145, 1
        %s964 = smul.addr %s963, 128
        %s965 = scalar_lea.vmem [#allocation5], %s964
        // Predicated region
        $region37: #{drnseg_forward.3} parent=31 // pred_check
          %p966 = pneg %p127
        $region38: #{drnseg_forward.3} parent=31 // pred_check_branch
          %968 = sbr.rel (%p966) target = $region40
        $region39: #{drnseg_forward.3} parent=31 // pred_region
          %s969 = smul.u32 4, %s27
          %s971 = ssub.s32 2048, 2048
          %972 = vsyncadd %s957, %s971
          %s973 = smul.addr %s26, 16
          %s974 = sadd.s32 %s969, %s973
          %s975 = smul.addr %s974, 128
          %s976 = scalar_lea.hbm %s3, %s975
          %s977 = sshll.u32 %s960, 4
          %s978 = int_to_ptr.vmem [resolvable:$true] %s977
          %983 = dma.vmem_to_hbm [thread:$0]  %s978, 2048, %s976, %s957, 128, 128, 8
        $region40: #{drnseg_forward.3} parent=31 // pred_fallthru
          _
        // Predicated region
        $region41: #{drnseg_forward.3} parent=31 // pred_check
          %p984 = pneg %p155
        $region42: #{drnseg_forward.3} parent=31 // pred_check_branch
          %986 = sbr.rel (%p984) target = $region44
        $region43: #{drnseg_forward.3} parent=31 // pred_region
          %s987 = smul.u32 4, %s27
          %s989 = ssub.s32 2048, 2048
          %990 = vsyncadd %s962, %s989
          %s991 = smul.addr %s26, 16
          %s992 = sadd.s32 %s987, %s991
          %s993 = smul.addr %s992, 128
          %s994 = scalar_lea.hbm %s4, %s993
          %s995 = sshll.u32 %s965, 4
          %s996 = int_to_ptr.vmem [resolvable:$true] %s995
          %1001 = dma.vmem_to_hbm [thread:$0]  %s996, 2048, %s994, %s962, 128, 128, 8
        $region44: #{drnseg_forward.3} parent=31 // pred_fallthru
          _
      $region32: #{drnseg_forward.3} parent=5 // pred_fallthru
        _
      %p1002 = scmp.le.s32.totalorder 2, %s17
      // Predicated region
      $region45: #{drnseg_forward.3} parent=5 // pred_check
        %p1003 = pneg %p1002
      $region46: #{drnseg_forward.3} parent=5 // pred_check_branch
        %1005 = sbr.rel (%p1003) target = $region48
      $region47: #{drnseg_forward.3} parent=5 // pred_region
        %s1006 = ssub.s32 %s17, 2
        // Predicated region
        $region49: #{drnseg_forward.3} parent=47 // pred_check
          %p1007 = pneg %p133
        $region50: #{drnseg_forward.3} parent=47 // pred_check_branch
          %1009 = sbr.rel (%p1007) target = $region52
        $region51: #{drnseg_forward.3} parent=47 // pred_region
          %s1010 = sand.u32 %s118, 1
          %s1011 = scalar_lea.sflag [#allocation4], %s1010
          %s1012 = sand.u32 %s118, 1
          %s1013 = smul.addr %s1012, 128
          %s1014 = scalar_lea.vmem [#allocation3], %s1013
          %1015 = dma.done %s1011, 2048
        $region52: #{drnseg_forward.3} parent=47 // pred_fallthru
          _
        // Predicated region
        $region53: #{drnseg_forward.3} parent=47 // pred_check
          %p1016 = pneg %p161
        $region54: #{drnseg_forward.3} parent=47 // pred_check_branch
          %1018 = sbr.rel (%p1016) target = $region56
        $region55: #{drnseg_forward.3} parent=47 // pred_region
          %s1019 = sand.u32 %s146, 1
          %s1020 = scalar_lea.sflag [#allocation6], %s1019
          %s1021 = sand.u32 %s146, 1
          %s1022 = smul.addr %s1021, 128
          %s1023 = scalar_lea.vmem [#allocation5], %s1022
          %1024 = dma.done %s1020, 2048
        $region56: #{drnseg_forward.3} parent=47 // pred_fallthru
          _
      $region48: #{drnseg_forward.3} parent=5 // pred_fallthru
        _
    $region6: #{drnseg_forward.3} parent=1 // loop_footer
      %s21 = sadd.s32 1, %s17
    $region7: #{drnseg_forward.3} parent=1 // loop_footer_branch
      %16 = sbr.rel target = $region3
    $region8: #{drnseg_forward.3} parent=1 // loop_exit
      _
    %1025 = vsyncpa [#allocation4], 1
    %s1026 = scalar_lea.sflag [#allocation4], 1
    %1027 = vsyncpa %s1026, 1
    %1028 = vsyncpa [#allocation6], 1
    %s1029 = scalar_lea.sflag [#allocation6], 1
    %1030 = vsyncpa %s1029, 1

</llo_original>
